<compile_context>
chip_gen: v7x
topology: tpu7x:2x2x1
jax: 0.10.0
libtpu: 0.0.40
codegen_flags: <defaults>
</compile_context>

<pallas_src>
import functools

import jax
import jax.numpy as jnp
from jax.experimental import pallas as pl
from jax.experimental.pallas import tpu as pltpu


def _round_up(x, m):
    return ((x + m - 1) // m) * m


def _classifier_kernel(x_ref, wbT_ref, bb_ref, whT_ref, bh_ref,
                       pred_ref, feat_ref, acc_ref,
                       *, hw_true, tile_n, tile_hw, needs_hw_mask):
    # x_ref   : (TILE_N, tile_hw, C_in)      input pixels (channels-last), bf16/f32
    # wbT_ref : (C_in, C_out_pad)            backbone 1x1-conv weight, pre-transposed
    # bb_ref  : (1, C_out_pad) f32           backbone bias
    # whT_ref : (C_out_pad, NC_pad) f32      head weight, pre-transposed
    # bh_ref  : (1, NC_pad) f32              head bias
    # pred_ref: (TILE_N, NC_pad)             output logits block
    # feat_ref: (TILE_N, C_out_pad)          output features block
    # acc_ref : (TILE_N, C_out_pad) f32      running per-sample pooled sum (VMEM scratch)
    hw_i = pl.program_id(1)
    last_hw = pl.num_programs(1) - 1

    @pl.when(hw_i == 0)
    def _init():
        acc_ref[...] = jnp.zeros_like(acc_ref)

    c_in = x_ref.shape[-1]
    m = tile_n * tile_hw
    x = x_ref[...].reshape(m, c_in)

    # Backbone: 1x1 conv == per-pixel channel matmul on the MXU (bf16 in, f32 accumulate),
    # then bias + ReLU in f32 on the VPU.
    fmap = jnp.dot(x, wbT_ref[...], preferred_element_type=jnp.float32)
    fmap = jnp.maximum(fmap + bb_ref[...], 0.0)
    fmap = fmap.reshape(tile_n, tile_hw, fmap.shape[-1])

    def _accumulate(mask_tail):
        f = fmap
        if mask_tail:
            # Zero-padded HW pixels are NOT neutral after bias+ReLU -> mask them out.
            p = jax.lax.broadcasted_iota(jnp.int32, (1, tile_hw, 1), 1)
            f = jnp.where(hw_i * tile_hw + p < hw_true, f, 0.0)
        # Global average pool (sum part): per-sample spatial sums on the VPU/XLU,
        # keeping the MXU free for the backbone matmul.
        acc_ref[...] += jnp.sum(f, axis=1)

    if needs_hw_mask:
        # Mask work only executes on the last HW tile.
        @pl.when(hw_i == last_hw)
        def _acc_masked():
            _accumulate(True)

        @pl.when(hw_i != last_hw)
        def _acc_plain():
            _accumulate(False)
    else:
        _accumulate(False)

    @pl.when(hw_i == last_hw)
    def _finalize():
        feat = acc_ref[...] * (1.0 / hw_true)            # mean over the true HW
        feat_ref[...] = feat.astype(feat_ref.dtype)      # bottleneck = Identity
        pred = jnp.dot(feat, whT_ref[...], preferred_element_type=jnp.float32) + bh_ref[...]
        pred_ref[...] = pred.astype(pred_ref.dtype)


def classifier_forward(x_nchw, wb, bb, wh, bh, *, tile_hw=512,
                       compute_dtype=jnp.bfloat16):
    """Fused Classifier forward pass. Returns (predictions, features)."""
    N, C_in, H, W = x_nchw.shape
    HW = H * W
    C_out = wb.shape[0]
    num_classes = wh.shape[0]

    # ---- TPU-friendly tile / pad sizes --------------------------------------
    C_out_pad = _round_up(C_out, 128)
    NC_pad = _round_up(num_classes, 128)

    # Batch tile: >= 8 (sublane), grows with N to amortize finalize/head matmul,
    # while keeping >= 2 N-tiles whenever possible (v7x megacore: 2 TCs share the
    # "parallel" axis; a single N tile would idle one core).
    N8 = _round_up(N, 8)
    if N8 >= 128:
        TILE_N = 64
    elif N8 >= 64:
        TILE_N = 32
    elif N8 >= 32:
        TILE_N = 16
    else:
        TILE_N = 8
    N_pad = _round_up(N, TILE_N)

    # HW tile: big tiles amortize the ~0.35us/grid-step overhead; cap so the f32
    # fmap temporary (TILE_N, tile_hw, C_out_pad) stays ~8 MiB even at large C_out.
    fmap_budget = 8 * 1024 * 1024
    hw_cap = max(8, (fmap_budget // (TILE_N * C_out_pad * 4)) // 8 * 8)
    tile_hw = max(8, min(_round_up(int(tile_hw), 8), hw_cap, _round_up(HW, 8)))
    HW_pad = _round_up(HW, tile_hw)
    needs_hw_mask = (HW_pad != HW)

    n_tiles_n = N_pad // TILE_N
    n_tiles_hw = HW_pad // tile_hw

    # ---- wrapper-side layout plumbing (channels-last, NO C_in lane padding) --
    # TODO(synk): accepting channels-last input directly would avoid this transpose
    # copy entirely; kept NCHW to match the PyTorch module's input contract.
    x = x_nchw.astype(compute_dtype)                    # cast first: halves transpose traffic
    x = jnp.transpose(x, (0, 2, 3, 1)).reshape(N, HW, C_in)
    x = jnp.pad(x, ((0, N_pad - N), (0, HW_pad - HW), (0, 0)))

    wbT = jnp.pad(wb.T.astype(compute_dtype),           # (C_in, C_out_pad) for the MXU
                  ((0, 0), (0, C_out_pad - C_out)))
    bb2 = jnp.pad(bb.astype(jnp.float32).reshape(1, C_out),
                  ((0, 0), (0, C_out_pad - C_out)))
    # Head stays f32: it runs once per batch tile -> negligible MXU work, best numerics.
    whT = jnp.pad(wh.T.astype(jnp.float32),
                  ((0, C_out_pad - C_out), (0, NC_pad - num_classes)))
    bh2 = jnp.pad(bh.astype(jnp.float32).reshape(1, num_classes),
                  ((0, 0), (0, NC_pad - num_classes)))

    kernel = functools.partial(
        _classifier_kernel, hw_true=HW, tile_n=TILE_N, tile_hw=tile_hw,
        needs_hw_mask=needs_hw_mask)

    in_itemsize = jnp.dtype(compute_dtype).itemsize
    flops = (2 * N_pad * HW_pad * C_in * C_out_pad       # backbone matmul
             + N_pad * HW_pad * C_out_pad                # pooling adds (VPU/XLU)
             + 2 * N_pad * C_out_pad * NC_pad)           # head matmul
    bytes_accessed = (x.size * in_itemsize + wbT.size * in_itemsize
                      + (bb2.size + whT.size + bh2.size) * 4
                      + (N_pad * NC_pad + N_pad * C_out_pad) * 4)

    # Explicit scoped-VMEM budget (v5e default is only 16 MiB; v7x physical is 64 MiB).
    # Double-buffered x/weight/bias/output blocks + acc scratch + fmap temporary.
    vmem_needed = (2 * TILE_N * tile_hw * max(C_in, 1) * in_itemsize
                   + 2 * C_in * C_out_pad * in_itemsize
                   + 2 * C_out_pad * 4
                   + 2 * C_out_pad * NC_pad * 4
                   + 2 * NC_pad * 4
                   + 2 * TILE_N * (NC_pad + C_out_pad) * 4
                   + TILE_N * C_out_pad * 4
                   + 2 * TILE_N * tile_hw * C_out_pad * 4)
    vmem_limit = int(min(48 * 1024 * 1024, max(32 * 1024 * 1024, 2 * vmem_needed)))

    preds_p, feats_p = pl.pallas_call(
        kernel,
        out_shape=(
            jax.ShapeDtypeStruct((N_pad, NC_pad), jnp.float32),
            jax.ShapeDtypeStruct((N_pad, C_out_pad), jnp.float32),
        ),
        grid=(n_tiles_n, n_tiles_hw),
        in_specs=[
            # x block: last dim == full C_in extent (legal without 128-padding).
            pl.BlockSpec((TILE_N, tile_hw, C_in), lambda ni, hi: (ni, hi, 0)),
            # Constant-index weight/bias blocks (at production channel counts these
            # would be worth single-buffering to halve their VMEM footprint).
            pl.BlockSpec((C_in, C_out_pad), lambda ni, hi: (0, 0)),
            pl.BlockSpec((1, C_out_pad), lambda ni, hi: (0, 0)),
            pl.BlockSpec((C_out_pad, NC_pad), lambda ni, hi: (0, 0)),
            pl.BlockSpec((1, NC_pad), lambda ni, hi: (0, 0)),
        ],
        out_specs=(
            pl.BlockSpec((TILE_N, NC_pad), lambda ni, hi: (ni, 0)),
            pl.BlockSpec((TILE_N, C_out_pad), lambda ni, hi: (ni, 0)),
        ),
        scratch_shapes=[pltpu.VMEM((TILE_N, C_out_pad), jnp.float32)],
        compiler_params=pltpu.CompilerParams(
            dimension_semantics=("parallel", "arbitrary"),
            vmem_limit_bytes=vmem_limit,
        ),
        cost_estimate=pl.CostEstimate(
            flops=flops, transcendentals=0, bytes_accessed=bytes_accessed),
    )(x, wbT, bb2, whT, bh2)

    # Slice the padding off.
    return preds_p[:N, :num_classes], feats_p[:N, :C_out]


def _reference_forward(x_nchw, wb, bb, wh, bh):
    # Pure-JAX reference mirroring the PyTorch module exactly (f32).
    fmap = jnp.einsum("nchw,oc->nohw", x_nchw, wb) + bb[None, :, None, None]
    fmap = jnp.maximum(fmap, 0.0)                  # backbone (1x1 conv + ReLU)
    feat = jnp.mean(fmap, axis=(2, 3))             # AdaptiveAvgPool2d((1,1)) + Flatten
    pred = feat @ wh.T + bh[None, :]               # nn.Linear head
    return pred, feat


def _run_case(key, N, C_in, H, W, C_out, num_classes, *, compute_dtype, tol, tile_hw=512):
    k_x, k_wb, k_bb, k_wh, k_bh = jax.random.split(key, 5)
    x = jax.random.normal(k_x, (N, C_in, H, W), dtype=jnp.float32)
    wb = jax.random.normal(k_wb, (C_out, C_in), dtype=jnp.float32) * (1.0 / jnp.sqrt(C_in))
    bb = jax.random.normal(k_bb, (C_out,), dtype=jnp.float32) * 0.01
    wh = jax.random.normal(k_wh, (num_classes, C_out), dtype=jnp.float32) * (1.0 / jnp.sqrt(C_out))
    bh = jax.random.normal(k_bh, (num_classes,), dtype=jnp.float32) * 0.01

    preds, feats = classifier_forward(x, wb, bb, wh, bh,
                                      tile_hw=tile_hw, compute_dtype=compute_dtype)
    jax.block_until_ready((preds, feats))

    ref_preds, ref_feats = _reference_forward(x, wb, bb, wh, bh)
    assert preds.shape == (N, num_classes)
    assert feats.shape == (N, C_out)
    assert jnp.allclose(feats, ref_feats, atol=tol, rtol=tol), "features mismatch"
    assert jnp.allclose(preds, ref_preds, atol=tol, rtol=tol), "predictions mismatch"


if __name__ == "__main__":
    key = jax.random.PRNGKey(0)
    k0, k1, k2 = jax.random.split(key, 3)

    # Case 1: module-consistent small shapes, f32 compute path (tight numerical check).
    _run_case(k0, N=2, C_in=4, H=16, W=16, C_out=32, num_classes=10,
              compute_dtype=jnp.float32, tol=1e-3)

    # Case 2: default bf16 streaming with a forced 2-step HW reduction (accumulator path).
    _run_case(k1, N=2, C_in=4, H=16, W=16, C_out=32, num_classes=10,
              compute_dtype=jnp.bfloat16, tol=3e-2, tile_hw=128)

    # Case 3: non-multiple spatial size + small tile -> multi-step reduction with the
    # last-tile-only HW-padding mask.
    _run_case(k2, N=2, C_in=4, H=13, W=13, C_out=32, num_classes=10,
              compute_dtype=jnp.bfloat16, tol=3e-2, tile_hw=64)

    print("KERNEL_OK")
</pallas_src>

<mosaic_0001>
module attributes {stable_mosaic.version = 11 : i64} {
  func.func @_classifier_kernel(%arg0: i32, %arg1: i32, %arg2: memref<8x256x4xf32, #tpu.memory_space<vmem>>, %arg3: memref<4x128xf32, #tpu.memory_space<vmem>>, %arg4: memref<1x128xf32, #tpu.memory_space<vmem>>, %arg5: memref<128x128xf32, #tpu.memory_space<vmem>>, %arg6: memref<1x128xf32, #tpu.memory_space<vmem>>, %arg7: memref<8x128xf32, #tpu.memory_space<vmem>>, %arg8: memref<8x128xf32, #tpu.memory_space<vmem>>, %arg9: memref<8x128xf32, #tpu.memory_space<vmem>>) attributes {dimension_semantics = [#tpu.dimension_semantics<parallel>, #tpu.dimension_semantics<arbitrary>], iteration_bounds = array<i64: 1, 1>, scalar_prefetch = 0 : i64, scratch_operands = 1 : i64, tpu.core_type = #tpu.core_type<tc>, window_params = [{transform_indices = @transform_0, window_bounds = array<i64: 8, 256, 4>}, {pipeline_mode = #tpu.pipeline_mode<synchronous>, transform_indices = @transform_1, window_bounds = array<i64: 4, 128>}, {pipeline_mode = #tpu.pipeline_mode<synchronous>, transform_indices = @transform_2, window_bounds = array<i64: 1, 128>}, {pipeline_mode = #tpu.pipeline_mode<synchronous>, transform_indices = @transform_3, window_bounds = array<i64: 128, 128>}, {pipeline_mode = #tpu.pipeline_mode<synchronous>, transform_indices = @transform_4, window_bounds = array<i64: 1, 128>}, {transform_indices = @transform_5, window_bounds = array<i64: 8, 128>}, {transform_indices = @transform_6, window_bounds = array<i64: 8, 128>}]} {
    %c0_i32 = arith.constant 0 : i32
    %0 = arith.cmpi eq, %arg1, %c0_i32 : i32
    %1 = arith.extui %0 : i1 to i32
    %c0_i32_0 = arith.constant 0 : i32
    %2 = arith.cmpi ne, %1, %c0_i32_0 : i32
    scf.if %2 {
      %cst_15 = arith.constant 0.000000e+00 : f32
      %20 = vector.broadcast %cst_15 : f32 to vector<8x128xf32>
      %c0_16 = arith.constant 0 : index
      %c0_17 = arith.constant 0 : index
      %21 = vector.load %arg9[%c0_16, %c0_17] : memref<8x128xf32, #tpu.memory_space<vmem>>, vector<8x128xf32>
      tpu.vector_store %arg9[%c0_16, %c0_17], %20 {strides = array<i32>} : memref<8x128xf32, #tpu.memory_space<vmem>>, vector<8x128xf32>,
    } else {
    }
    %c0 = arith.constant 0 : index
    %c0_1 = arith.constant 0 : index
    %c0_2 = arith.constant 0 : index
    %3 = vector.load %arg2[%c0, %c0_1, %c0_2] : memref<8x256x4xf32, #tpu.memory_space<vmem>>, vector<8x256x4xf32>
    %4 = vector.shape_cast %3 : vector<8x256x4xf32> to vector<2048x4xf32>
    %c0_3 = arith.constant 0 : index
    %c0_4 = arith.constant 0 : index
    %5 = vector.load %arg3[%c0_3, %c0_4] : memref<4x128xf32, #tpu.memory_space<vmem>>, vector<4x128xf32>
    %cst = arith.constant dense<0.000000e+00> : vector<2048x128xf32>
    %6 = tpu.matmul %4, %5, %cst {dimension_numbers = #tpu.dot_dimension_numbers<[1], [0], [0], [1], [0, 0, 1, 1], [], []>} : vector<2048x4xf32>, vector<4x128xf32>, vector<2048x128xf32> -> vector<2048x128xf32>
    %c0_5 = arith.constant 0 : index
    %c0_6 = arith.constant 0 : index
    %7 = vector.load %arg4[%c0_5, %c0_6] : memref<1x128xf32, #tpu.memory_space<vmem>>, vector<1x128xf32>
    %8 = vector.broadcast %7 : vector<1x128xf32> to vector<2048x128xf32>
    %9 = arith.addf %6, %8 : vector<2048x128xf32>
    %cst_7 = arith.constant 0.000000e+00 : f32
    %10 = vector.broadcast %cst_7 : f32 to vector<2048x128xf32>
    %11 = arith.maximumf %9, %10 : vector<2048x128xf32>
    %12 = vector.shape_cast %11 : vector<2048x128xf32> to vector<8x256x128xf32>
    %c0_8 = arith.constant 0 : index
    %c0_9 = arith.constant 0 : index
    %13 = vector.load %arg9[%c0_8, %c0_9] : memref<8x128xf32, #tpu.memory_space<vmem>>, vector<8x128xf32>
    %cst_10 = arith.constant dense<0.000000e+00> : vector<8x128xf32>
    %14 = vector.multi_reduction <add>, %12, %cst_10 [1] : vector<8x256x128xf32> to vector<8x128xf32>
    %15 = arith.addf %13, %14 : vector<8x128xf32>
    %c0_11 = arith.constant 0 : index
    %c0_12 = arith.constant 0 : index
    %16 = vector.load %arg9[%c0_11, %c0_12] : memref<8x128xf32, #tpu.memory_space<vmem>>, vector<8x128xf32>
    tpu.vector_store %arg9[%c0_11, %c0_12], %15 {strides = array<i32>} : memref<8x128xf32, #tpu.memory_space<vmem>>, vector<8x128xf32>,
    %c0_i32_13 = arith.constant 0 : i32
    %17 = arith.cmpi eq, %arg1, %c0_i32_13 : i32
    %18 = arith.extui %17 : i1 to i32
    %c0_i32_14 = arith.constant 0 : i32
    %19 = arith.cmpi ne, %18, %c0_i32_14 : i32
    scf.if %19 {
      %c0_15 = arith.constant 0 : index
      %c0_16 = arith.constant 0 : index
      %20 = vector.load %arg9[%c0_15, %c0_16] : memref<8x128xf32, #tpu.memory_space<vmem>>, vector<8x128xf32>
      %cst_17 = arith.constant 3.906250e-03 : f32
      %21 = vector.broadcast %cst_17 : f32 to vector<8x128xf32>
      %22 = arith.mulf %20, %21 : vector<8x128xf32>
      %c0_18 = arith.constant 0 : index
      %c0_19 = arith.constant 0 : index
      %23 = vector.load %arg8[%c0_18, %c0_19] : memref<8x128xf32, #tpu.memory_space<vmem>>, vector<8x128xf32>
      tpu.vector_store %arg8[%c0_18, %c0_19], %22 {strides = array<i32>} : memref<8x128xf32, #tpu.memory_space<vmem>>, vector<8x128xf32>,
      %c0_20 = arith.constant 0 : index
      %c0_21 = arith.constant 0 : index
      %24 = vector.load %arg5[%c0_20, %c0_21] : memref<128x128xf32, #tpu.memory_space<vmem>>, vector<128x128xf32>
      %cst_22 = arith.constant dense<0.000000e+00> : vector<8x128xf32>
      %25 = tpu.matmul %22, %24, %cst_22 {dimension_numbers = #tpu.dot_dimension_numbers<[1], [0], [0], [1], [0, 0, 1, 1], [], []>} : vector<8x128xf32>, vector<128x128xf32>, vector<8x128xf32> -> vector<8x128xf32>
      %c0_23 = arith.constant 0 : index
      %c0_24 = arith.constant 0 : index
      %26 = vector.load %arg6[%c0_23, %c0_24] : memref<1x128xf32, #tpu.memory_space<vmem>>, vector<1x128xf32>
      %27 = vector.broadcast %26 : vector<1x128xf32> to vector<8x128xf32>
      %28 = arith.addf %25, %27 : vector<8x128xf32>
      %c0_25 = arith.constant 0 : index
      %c0_26 = arith.constant 0 : index
      %29 = vector.load %arg7[%c0_25, %c0_26] : memref<8x128xf32, #tpu.memory_space<vmem>>, vector<8x128xf32>
      tpu.vector_store %arg7[%c0_25, %c0_26], %28 {strides = array<i32>} : memref<8x128xf32, #tpu.memory_space<vmem>>, vector<8x128xf32>,
    } else {
    }
    return
  }
  func.func @transform_0(%arg0: i32, %arg1: i32) -> (i32, i32, i32) {
    %c0_i32 = arith.constant 0 : i32
    %c0_i32_0 = arith.constant 0 : i32
    return %arg0, %arg1, %c0_i32 : i32, i32, i32
  }
  func.func @transform_1(%arg0: i32, %arg1: i32) -> (i32, i32) {
    %c0_i32 = arith.constant 0 : i32
    %c0_i32_0 = arith.constant 0 : i32
    %c0_i32_1 = arith.constant 0 : i32
    return %c0_i32, %c0_i32_0 : i32, i32
  }
  func.func @transform_2(%arg0: i32, %arg1: i32) -> (i32, i32) {
    %c0_i32 = arith.constant 0 : i32
    %c0_i32_0 = arith.constant 0 : i32
    %c0_i32_1 = arith.constant 0 : i32
    return %c0_i32, %c0_i32_0 : i32, i32
  }
  func.func @transform_3(%arg0: i32, %arg1: i32) -> (i32, i32) {
    %c0_i32 = arith.constant 0 : i32
    %c0_i32_0 = arith.constant 0 : i32
    %c0_i32_1 = arith.constant 0 : i32
    return %c0_i32, %c0_i32_0 : i32, i32
  }
  func.func @transform_4(%arg0: i32, %arg1: i32) -> (i32, i32) {
    %c0_i32 = arith.constant 0 : i32
    %c0_i32_0 = arith.constant 0 : i32
    %c0_i32_1 = arith.constant 0 : i32
    return %c0_i32, %c0_i32_0 : i32, i32
  }
  func.func @transform_5(%arg0: i32, %arg1: i32) -> (i32, i32) {
    %c0_i32 = arith.constant 0 : i32
    %c0_i32_0 = arith.constant 0 : i32
    return %arg0, %c0_i32 : i32, i32
  }
  func.func @transform_6(%arg0: i32, %arg1: i32) -> (i32, i32) {
    %c0_i32 = arith.constant 0 : i32
    %c0_i32_0 = arith.constant 0 : i32
    return %arg0, %c0_i32 : i32, i32
  }
}

</mosaic_0001>

<llo_original>
// kernel: tpu_custom_call.1
$region0: #{tpu_custom_call.1}
  #allocation0 [shape = 'u32[]', space=smem, size = 0x4, offset = 0x4, fixed_abs, tag = 'smem constant byte address 0x4 - core index']
  #allocation1 [shape = 'u32[144,128]{1,0:T(1,128)}', space=vmem, size = 0x12000, scoped, tag = 'internal scratch']
  #allocation2 [shape = 'f32[8,128]{1,0:T(8,128)}', space=vmem, size = 0x1000, scoped, tag = 'scratch operand']
  %s0 = inlined_call_operand.vmem [shape: f32[8,256,4], index: 0, kind: input, shape index: {}]
  %s1 = inlined_call_operand.vmem [shape: f32[4,128], index: 1, kind: input, shape index: {}]
  %s2 = inlined_call_operand.vmem [shape: f32[1,128], index: 2, kind: input, shape index: {}]
  %s3 = inlined_call_operand.vmem [shape: f32[128,128], index: 3, kind: input, shape index: {}]
  %s4 = inlined_call_operand.vmem [shape: f32[1,128], index: 4, kind: input, shape index: {}]
  %s5 = inlined_call_operand.hbm [shape: f32[8,128], index: 5, kind: output, shape index: {0}]
  %s6 = inlined_call_operand.hbm [shape: f32[8,128], index: 6, kind: output, shape index: {1}]
  %7 = xla_tuple %s5, %s6
  %s8 = sld [smem:[#allocation0]]
  $region46: #{tpu_custom_call.1} parent=0
    _
  %s10 = ssub.s32 1, %s8
  %s11 = scalar_select 0, %s10, %s8
  $region1: #{tpu_custom_call.1} parent=0
    #allocation3 [shape = 'u8[4096]{0}', space=vmem, size = 0x1000, scoped, tag = 'output window, operand 0, single buffered']
    #allocation4 [shape = 's32[1]{0}', space=sflag, size = 0x4, scoped, tag = 'scoped memory for tpu_custom_call.1']
    #allocation5 [shape = 'u8[4096]{0}', space=vmem, size = 0x1000, scoped, tag = 'output window, operand 1, single buffered']
    #allocation6 [shape = 's32[1]{0}', space=sflag, size = 0x4, scoped, tag = 'scoped memory for tpu_custom_call.1']
    %12 = vsyncpa [#allocation4], 0
    %13 = vsyncpa [#allocation6], 0
    // Predicated region
    $region2: #{tpu_custom_call.1} parent=1 // pred_check
      _
    $region3: #{tpu_custom_call.1} parent=1 // pred_check_branch
      %15 = sbr.rel (0) target = $region5
    $region4: #{tpu_custom_call.1} parent=1 // pred_region
      _
    $region5: #{tpu_custom_call.1} parent=1 // pred_fallthru
      _
    // Predicated region
    $region6: #{tpu_custom_call.1} parent=1 // pred_check
      _
    $region7: #{tpu_custom_call.1} parent=1 // pred_check_branch
      %17 = sbr.rel (0) target = $region9
    $region8: #{tpu_custom_call.1} parent=1 // pred_region
      _
    $region9: #{tpu_custom_call.1} parent=1 // pred_fallthru
      _
    // Predicated region
    $region10: #{tpu_custom_call.1} parent=1 // pred_check
      _
    $region11: #{tpu_custom_call.1} parent=1 // pred_check_branch
      %19 = sbr.rel (0) target = $region13
    $region12: #{tpu_custom_call.1} parent=1 // pred_region
      _
    $region13: #{tpu_custom_call.1} parent=1 // pred_fallthru
      _
    // Predicated region
    $region14: #{tpu_custom_call.1} parent=1 // pred_check
      _
    $region15: #{tpu_custom_call.1} parent=1 // pred_check_branch
      %21 = sbr.rel (0) target = $region17
    $region16: #{tpu_custom_call.1} parent=1 // pred_region
      _
    $region17: #{tpu_custom_call.1} parent=1 // pred_fallthru
      _
    // Predicated region
    $region18: #{tpu_custom_call.1} parent=1 // pred_check
      _
    $region19: #{tpu_custom_call.1} parent=1 // pred_check_branch
      %23 = sbr.rel (0) target = $region21
    $region20: #{tpu_custom_call.1} parent=1 // pred_region
      _
    $region21: #{tpu_custom_call.1} parent=1 // pred_fallthru
      _
    %p24 = scmp.eq.s32.totalorder 0, 0
    // Predicated region
    $region22: #{tpu_custom_call.1} parent=1 // pred_check
      %p25 = pneg %p24
    $region23: #{tpu_custom_call.1} parent=1 // pred_check_branch
      %27 = sbr.rel (%p25) target = $region25
    $region24: #{tpu_custom_call.1} parent=1 // pred_region
      %28 = vst [vmem:[#allocation2] sm:$0xff] 0.0
    $region25: #{tpu_custom_call.1} parent=1 // pred_fallthru
      _
    %v29 = vld [vmem:[%s0] sm:$0xff]
    %v30 = vld [vmem:[%s0 + $0x8] sm:$0xff]
    %v31 = vld [vmem:[%s0 + $0x10] sm:$0xff]
    %v32 = vld [vmem:[%s0 + $0x18] sm:$0xff]
    %v33 = vld [vmem:[%s0 + $0x20] sm:$0xff]
    %v34 = vld [vmem:[%s0 + $0x28] sm:$0xff]
    %v35 = vld [vmem:[%s0 + $0x30] sm:$0xff]
    %v36 = vld [vmem:[%s0 + $0x38] sm:$0xff]
    %v37 = vld [vmem:[%s0 + $0x40] sm:$0xff]
    %v38 = vld [vmem:[%s0 + $0x48] sm:$0xff]
    %v39 = vld [vmem:[%s0 + $0x50] sm:$0xff]
    %v40 = vld [vmem:[%s0 + $0x58] sm:$0xff]
    %v41 = vld [vmem:[%s0 + $0x60] sm:$0xff]
    %v42 = vld [vmem:[%s0 + $0x68] sm:$0xff]
    %v43 = vld [vmem:[%s0 + $0x70] sm:$0xff]
    %v44 = vld [vmem:[%s0 + $0x78] sm:$0xff]
    %v45 = vld [vmem:[%s0 + $0x80] sm:$0xff]
    %v46 = vld [vmem:[%s0 + $0x88] sm:$0xff]
    %v47 = vld [vmem:[%s0 + $0x90] sm:$0xff]
    %v48 = vld [vmem:[%s0 + $0x98] sm:$0xff]
    %v49 = vld [vmem:[%s0 + $0xa0] sm:$0xff]
    %v50 = vld [vmem:[%s0 + $0xa8] sm:$0xff]
    %v51 = vld [vmem:[%s0 + $0xb0] sm:$0xff]
    %v52 = vld [vmem:[%s0 + $0xb8] sm:$0xff]
    %v53 = vld [vmem:[%s0 + $0xc0] sm:$0xff]
    %v54 = vld [vmem:[%s0 + $0xc8] sm:$0xff]
    %v55 = vld [vmem:[%s0 + $0xd0] sm:$0xff]
    %v56 = vld [vmem:[%s0 + $0xd8] sm:$0xff]
    %v57 = vld [vmem:[%s0 + $0xe0] sm:$0xff]
    %v58 = vld [vmem:[%s0 + $0xe8] sm:$0xff]
    %v59 = vld [vmem:[%s0 + $0xf0] sm:$0xff]
    %v60 = vld [vmem:[%s0 + $0xf8] sm:$0xff]
    %v61 = vld [vmem:[%s0 + $0x100] sm:$0xff]
    %v62 = vld [vmem:[%s0 + $0x108] sm:$0xff]
    %v63 = vld [vmem:[%s0 + $0x110] sm:$0xff]
    %v64 = vld [vmem:[%s0 + $0x118] sm:$0xff]
    %v65 = vld [vmem:[%s0 + $0x120] sm:$0xff]
    %v66 = vld [vmem:[%s0 + $0x128] sm:$0xff]
    %v67 = vld [vmem:[%s0 + $0x130] sm:$0xff]
    %v68 = vld [vmem:[%s0 + $0x138] sm:$0xff]
    %v69 = vld [vmem:[%s0 + $0x140] sm:$0xff]
    %v70 = vld [vmem:[%s0 + $0x148] sm:$0xff]
    %v71 = vld [vmem:[%s0 + $0x150] sm:$0xff]
    %v72 = vld [vmem:[%s0 + $0x158] sm:$0xff]
    %v73 = vld [vmem:[%s0 + $0x160] sm:$0xff]
    %v74 = vld [vmem:[%s0 + $0x168] sm:$0xff]
    %v75 = vld [vmem:[%s0 + $0x170] sm:$0xff]
    %v76 = vld [vmem:[%s0 + $0x178] sm:$0xff]
    %v77 = vld [vmem:[%s0 + $0x180] sm:$0xff]
    %v78 = vld [vmem:[%s0 + $0x188] sm:$0xff]
    %v79 = vld [vmem:[%s0 + $0x190] sm:$0xff]
    %v80 = vld [vmem:[%s0 + $0x198] sm:$0xff]
    %v81 = vld [vmem:[%s0 + $0x1a0] sm:$0xff]
    %v82 = vld [vmem:[%s0 + $0x1a8] sm:$0xff]
    %v83 = vld [vmem:[%s0 + $0x1b0] sm:$0xff]
    %v84 = vld [vmem:[%s0 + $0x1b8] sm:$0xff]
    %v85 = vld [vmem:[%s0 + $0x1c0] sm:$0xff]
    %v86 = vld [vmem:[%s0 + $0x1c8] sm:$0xff]
    %v87 = vld [vmem:[%s0 + $0x1d0] sm:$0xff]
    %v88 = vld [vmem:[%s0 + $0x1d8] sm:$0xff]
    %v89 = vld [vmem:[%s0 + $0x1e0] sm:$0xff]
    %v90 = vld [vmem:[%s0 + $0x1e8] sm:$0xff]
    %v91 = vld [vmem:[%s0 + $0x1f0] sm:$0xff]
    %v92 = vld [vmem:[%s0 + $0x1f8] sm:$0xff]
    %v93 = vld [vmem:[%s0 + $0x200] sm:$0xff]
    %v94 = vld [vmem:[%s0 + $0x208] sm:$0xff]
    %v95 = vld [vmem:[%s0 + $0x210] sm:$0xff]
    %v96 = vld [vmem:[%s0 + $0x218] sm:$0xff]
    %v97 = vld [vmem:[%s0 + $0x220] sm:$0xff]
    %v98 = vld [vmem:[%s0 + $0x228] sm:$0xff]
    %v99 = vld [vmem:[%s0 + $0x230] sm:$0xff]
    %v100 = vld [vmem:[%s0 + $0x238] sm:$0xff]
    %v101 = vld [vmem:[%s0 + $0x240] sm:$0xff]
    %v102 = vld [vmem:[%s0 + $0x248] sm:$0xff]
    %v103 = vld [vmem:[%s0 + $0x250] sm:$0xff]
    %v104 = vld [vmem:[%s0 + $0x258] sm:$0xff]
    %v105 = vld [vmem:[%s0 + $0x260] sm:$0xff]
    %v106 = vld [vmem:[%s0 + $0x268] sm:$0xff]
    %v107 = vld [vmem:[%s0 + $0x270] sm:$0xff]
    %v108 = vld [vmem:[%s0 + $0x278] sm:$0xff]
    %v109 = vld [vmem:[%s0 + $0x280] sm:$0xff]
    %v110 = vld [vmem:[%s0 + $0x288] sm:$0xff]
    %v111 = vld [vmem:[%s0 + $0x290] sm:$0xff]
    %v112 = vld [vmem:[%s0 + $0x298] sm:$0xff]
    %v113 = vld [vmem:[%s0 + $0x2a0] sm:$0xff]
    %v114 = vld [vmem:[%s0 + $0x2a8] sm:$0xff]
    %v115 = vld [vmem:[%s0 + $0x2b0] sm:$0xff]
    %v116 = vld [vmem:[%s0 + $0x2b8] sm:$0xff]
    %v117 = vld [vmem:[%s0 + $0x2c0] sm:$0xff]
    %v118 = vld [vmem:[%s0 + $0x2c8] sm:$0xff]
    %v119 = vld [vmem:[%s0 + $0x2d0] sm:$0xff]
    %v120 = vld [vmem:[%s0 + $0x2d8] sm:$0xff]
    %v121 = vld [vmem:[%s0 + $0x2e0] sm:$0xff]
    %v122 = vld [vmem:[%s0 + $0x2e8] sm:$0xff]
    %v123 = vld [vmem:[%s0 + $0x2f0] sm:$0xff]
    %v124 = vld [vmem:[%s0 + $0x2f8] sm:$0xff]
    %v125 = vld [vmem:[%s0 + $0x300] sm:$0xff]
    %v126 = vld [vmem:[%s0 + $0x308] sm:$0xff]
    %v127 = vld [vmem:[%s0 + $0x310] sm:$0xff]
    %v128 = vld [vmem:[%s0 + $0x318] sm:$0xff]
    %v129 = vld [vmem:[%s0 + $0x320] sm:$0xff]
    %v130 = vld [vmem:[%s0 + $0x328] sm:$0xff]
    %v131 = vld [vmem:[%s0 + $0x330] sm:$0xff]
    %v132 = vld [vmem:[%s0 + $0x338] sm:$0xff]
    %v133 = vld [vmem:[%s0 + $0x340] sm:$0xff]
    %v134 = vld [vmem:[%s0 + $0x348] sm:$0xff]
    %v135 = vld [vmem:[%s0 + $0x350] sm:$0xff]
    %v136 = vld [vmem:[%s0 + $0x358] sm:$0xff]
    %v137 = vld [vmem:[%s0 + $0x360] sm:$0xff]
    %v138 = vld [vmem:[%s0 + $0x368] sm:$0xff]
    %v139 = vld [vmem:[%s0 + $0x370] sm:$0xff]
    %v140 = vld [vmem:[%s0 + $0x378] sm:$0xff]
    %v141 = vld [vmem:[%s0 + $0x380] sm:$0xff]
    %v142 = vld [vmem:[%s0 + $0x388] sm:$0xff]
    %v143 = vld [vmem:[%s0 + $0x390] sm:$0xff]
    %v144 = vld [vmem:[%s0 + $0x398] sm:$0xff]
    %v145 = vld [vmem:[%s0 + $0x3a0] sm:$0xff]
    %v146 = vld [vmem:[%s0 + $0x3a8] sm:$0xff]
    %v147 = vld [vmem:[%s0 + $0x3b0] sm:$0xff]
    %v148 = vld [vmem:[%s0 + $0x3b8] sm:$0xff]
    %v149 = vld [vmem:[%s0 + $0x3c0] sm:$0xff]
    %v150 = vld [vmem:[%s0 + $0x3c8] sm:$0xff]
    %v151 = vld [vmem:[%s0 + $0x3d0] sm:$0xff]
    %v152 = vld [vmem:[%s0 + $0x3d8] sm:$0xff]
    %v153 = vld [vmem:[%s0 + $0x3e0] sm:$0xff]
    %v154 = vld [vmem:[%s0 + $0x3e8] sm:$0xff]
    %v155 = vld [vmem:[%s0 + $0x3f0] sm:$0xff]
    %v156 = vld [vmem:[%s0 + $0x3f8] sm:$0xff]
    %v157 = vld [vmem:[%s0 + $0x400] sm:$0xff]
    %v158 = vld [vmem:[%s0 + $0x408] sm:$0xff]
    %v159 = vld [vmem:[%s0 + $0x410] sm:$0xff]
    %v160 = vld [vmem:[%s0 + $0x418] sm:$0xff]
    %v161 = vld [vmem:[%s0 + $0x420] sm:$0xff]
    %v162 = vld [vmem:[%s0 + $0x428] sm:$0xff]
    %v163 = vld [vmem:[%s0 + $0x430] sm:$0xff]
    %v164 = vld [vmem:[%s0 + $0x438] sm:$0xff]
    %v165 = vld [vmem:[%s0 + $0x440] sm:$0xff]
    %v166 = vld [vmem:[%s0 + $0x448] sm:$0xff]
    %v167 = vld [vmem:[%s0 + $0x450] sm:$0xff]
    %v168 = vld [vmem:[%s0 + $0x458] sm:$0xff]
    %v169 = vld [vmem:[%s0 + $0x460] sm:$0xff]
    %v170 = vld [vmem:[%s0 + $0x468] sm:$0xff]
    %v171 = vld [vmem:[%s0 + $0x470] sm:$0xff]
    %v172 = vld [vmem:[%s0 + $0x478] sm:$0xff]
    %v173 = vld [vmem:[%s0 + $0x480] sm:$0xff]
    %v174 = vld [vmem:[%s0 + $0x488] sm:$0xff]
    %v175 = vld [vmem:[%s0 + $0x490] sm:$0xff]
    %v176 = vld [vmem:[%s0 + $0x498] sm:$0xff]
    %v177 = vld [vmem:[%s0 + $0x4a0] sm:$0xff]
    %v178 = vld [vmem:[%s0 + $0x4a8] sm:$0xff]
    %v179 = vld [vmem:[%s0 + $0x4b0] sm:$0xff]
    %v180 = vld [vmem:[%s0 + $0x4b8] sm:$0xff]
    %v181 = vld [vmem:[%s0 + $0x4c0] sm:$0xff]
    %v182 = vld [vmem:[%s0 + $0x4c8] sm:$0xff]
    %v183 = vld [vmem:[%s0 + $0x4d0] sm:$0xff]
    %v184 = vld [vmem:[%s0 + $0x4d8] sm:$0xff]
    %v185 = vld [vmem:[%s0 + $0x4e0] sm:$0xff]
    %v186 = vld [vmem:[%s0 + $0x4e8] sm:$0xff]
    %v187 = vld [vmem:[%s0 + $0x4f0] sm:$0xff]
    %v188 = vld [vmem:[%s0 + $0x4f8] sm:$0xff]
    %v189 = vld [vmem:[%s0 + $0x500] sm:$0xff]
    %v190 = vld [vmem:[%s0 + $0x508] sm:$0xff]
    %v191 = vld [vmem:[%s0 + $0x510] sm:$0xff]
    %v192 = vld [vmem:[%s0 + $0x518] sm:$0xff]
    %v193 = vld [vmem:[%s0 + $0x520] sm:$0xff]
    %v194 = vld [vmem:[%s0 + $0x528] sm:$0xff]
    %v195 = vld [vmem:[%s0 + $0x530] sm:$0xff]
    %v196 = vld [vmem:[%s0 + $0x538] sm:$0xff]
    %v197 = vld [vmem:[%s0 + $0x540] sm:$0xff]
    %v198 = vld [vmem:[%s0 + $0x548] sm:$0xff]
    %v199 = vld [vmem:[%s0 + $0x550] sm:$0xff]
    %v200 = vld [vmem:[%s0 + $0x558] sm:$0xff]
    %v201 = vld [vmem:[%s0 + $0x560] sm:$0xff]
    %v202 = vld [vmem:[%s0 + $0x568] sm:$0xff]
    %v203 = vld [vmem:[%s0 + $0x570] sm:$0xff]
    %v204 = vld [vmem:[%s0 + $0x578] sm:$0xff]
    %v205 = vld [vmem:[%s0 + $0x580] sm:$0xff]
    %v206 = vld [vmem:[%s0 + $0x588] sm:$0xff]
    %v207 = vld [vmem:[%s0 + $0x590] sm:$0xff]
    %v208 = vld [vmem:[%s0 + $0x598] sm:$0xff]
    %v209 = vld [vmem:[%s0 + $0x5a0] sm:$0xff]
    %v210 = vld [vmem:[%s0 + $0x5a8] sm:$0xff]
    %v211 = vld [vmem:[%s0 + $0x5b0] sm:$0xff]
    %v212 = vld [vmem:[%s0 + $0x5b8] sm:$0xff]
    %v213 = vld [vmem:[%s0 + $0x5c0] sm:$0xff]
    %v214 = vld [vmem:[%s0 + $0x5c8] sm:$0xff]
    %v215 = vld [vmem:[%s0 + $0x5d0] sm:$0xff]
    %v216 = vld [vmem:[%s0 + $0x5d8] sm:$0xff]
    %v217 = vld [vmem:[%s0 + $0x5e0] sm:$0xff]
    %v218 = vld [vmem:[%s0 + $0x5e8] sm:$0xff]
    %v219 = vld [vmem:[%s0 + $0x5f0] sm:$0xff]
    %v220 = vld [vmem:[%s0 + $0x5f8] sm:$0xff]
    %v221 = vld [vmem:[%s0 + $0x600] sm:$0xff]
    %v222 = vld [vmem:[%s0 + $0x608] sm:$0xff]
    %v223 = vld [vmem:[%s0 + $0x610] sm:$0xff]
    %v224 = vld [vmem:[%s0 + $0x618] sm:$0xff]
    %v225 = vld [vmem:[%s0 + $0x620] sm:$0xff]
    %v226 = vld [vmem:[%s0 + $0x628] sm:$0xff]
    %v227 = vld [vmem:[%s0 + $0x630] sm:$0xff]
    %v228 = vld [vmem:[%s0 + $0x638] sm:$0xff]
    %v229 = vld [vmem:[%s0 + $0x640] sm:$0xff]
    %v230 = vld [vmem:[%s0 + $0x648] sm:$0xff]
    %v231 = vld [vmem:[%s0 + $0x650] sm:$0xff]
    %v232 = vld [vmem:[%s0 + $0x658] sm:$0xff]
    %v233 = vld [vmem:[%s0 + $0x660] sm:$0xff]
    %v234 = vld [vmem:[%s0 + $0x668] sm:$0xff]
    %v235 = vld [vmem:[%s0 + $0x670] sm:$0xff]
    %v236 = vld [vmem:[%s0 + $0x678] sm:$0xff]
    %v237 = vld [vmem:[%s0 + $0x680] sm:$0xff]
    %v238 = vld [vmem:[%s0 + $0x688] sm:$0xff]
    %v239 = vld [vmem:[%s0 + $0x690] sm:$0xff]
    %v240 = vld [vmem:[%s0 + $0x698] sm:$0xff]
    %v241 = vld [vmem:[%s0 + $0x6a0] sm:$0xff]
    %v242 = vld [vmem:[%s0 + $0x6a8] sm:$0xff]
    %v243 = vld [vmem:[%s0 + $0x6b0] sm:$0xff]
    %v244 = vld [vmem:[%s0 + $0x6b8] sm:$0xff]
    %v245 = vld [vmem:[%s0 + $0x6c0] sm:$0xff]
    %v246 = vld [vmem:[%s0 + $0x6c8] sm:$0xff]
    %v247 = vld [vmem:[%s0 + $0x6d0] sm:$0xff]
    %v248 = vld [vmem:[%s0 + $0x6d8] sm:$0xff]
    %v249 = vld [vmem:[%s0 + $0x6e0] sm:$0xff]
    %v250 = vld [vmem:[%s0 + $0x6e8] sm:$0xff]
    %v251 = vld [vmem:[%s0 + $0x6f0] sm:$0xff]
    %v252 = vld [vmem:[%s0 + $0x6f8] sm:$0xff]
    %v253 = vld [vmem:[%s0 + $0x700] sm:$0xff]
    %v254 = vld [vmem:[%s0 + $0x708] sm:$0xff]
    %v255 = vld [vmem:[%s0 + $0x710] sm:$0xff]
    %v256 = vld [vmem:[%s0 + $0x718] sm:$0xff]
    %v257 = vld [vmem:[%s0 + $0x720] sm:$0xff]
    %v258 = vld [vmem:[%s0 + $0x728] sm:$0xff]
    %v259 = vld [vmem:[%s0 + $0x730] sm:$0xff]
    %v260 = vld [vmem:[%s0 + $0x738] sm:$0xff]
    %v261 = vld [vmem:[%s0 + $0x740] sm:$0xff]
    %v262 = vld [vmem:[%s0 + $0x748] sm:$0xff]
    %v263 = vld [vmem:[%s0 + $0x750] sm:$0xff]
    %v264 = vld [vmem:[%s0 + $0x758] sm:$0xff]
    %v265 = vld [vmem:[%s0 + $0x760] sm:$0xff]
    %v266 = vld [vmem:[%s0 + $0x768] sm:$0xff]
    %v267 = vld [vmem:[%s0 + $0x770] sm:$0xff]
    %v268 = vld [vmem:[%s0 + $0x778] sm:$0xff]
    %v269 = vld [vmem:[%s0 + $0x780] sm:$0xff]
    %v270 = vld [vmem:[%s0 + $0x788] sm:$0xff]
    %v271 = vld [vmem:[%s0 + $0x790] sm:$0xff]
    %v272 = vld [vmem:[%s0 + $0x798] sm:$0xff]
    %v273 = vld [vmem:[%s0 + $0x7a0] sm:$0xff]
    %v274 = vld [vmem:[%s0 + $0x7a8] sm:$0xff]
    %v275 = vld [vmem:[%s0 + $0x7b0] sm:$0xff]
    %v276 = vld [vmem:[%s0 + $0x7b8] sm:$0xff]
    %v277 = vld [vmem:[%s0 + $0x7c0] sm:$0xff]
    %v278 = vld [vmem:[%s0 + $0x7c8] sm:$0xff]
    %v279 = vld [vmem:[%s0 + $0x7d0] sm:$0xff]
    %v280 = vld [vmem:[%s0 + $0x7d8] sm:$0xff]
    %v281 = vld [vmem:[%s0 + $0x7e0] sm:$0xff]
    %v282 = vld [vmem:[%s0 + $0x7e8] sm:$0xff]
    %v283 = vld [vmem:[%s0 + $0x7f0] sm:$0xff]
    %v284 = vld [vmem:[%s0 + $0x7f8] sm:$0xff]
    %v285 = vld [vmem:[%s1] sm:$0xf]
    %v286 = vld [vmem:[%s2] sm:$0x1]
    %v288 = vlaneseq
    %v289 = vshrl.u32 %v288, 7
    %v290 = vsub.s32 0, %v289
    %v291 = vrot.slane %v286, %v290
    %vm293 = vcmask 31744
    %v295 = vsel %vm293, %v29, 0
    %v298 = vsel %vm293, %v30, 0
    %v301 = vsel %vm293, %v31, 0
    %v304 = vsel %vm293, %v32, 0
    %v307 = vsel %vm293, %v33, 0
    %v310 = vsel %vm293, %v34, 0
    %v313 = vsel %vm293, %v35, 0
    %v316 = vsel %vm293, %v36, 0
    %v319 = vsel %vm293, %v37, 0
    %v322 = vsel %vm293, %v38, 0
    %v325 = vsel %vm293, %v39, 0
    %v328 = vsel %vm293, %v40, 0
    %v331 = vsel %vm293, %v41, 0
    %v334 = vsel %vm293, %v42, 0
    %v337 = vsel %vm293, %v43, 0
    %v340 = vsel %vm293, %v44, 0
    %v343 = vsel %vm293, %v45, 0
    %v346 = vsel %vm293, %v46, 0
    %v349 = vsel %vm293, %v47, 0
    %v352 = vsel %vm293, %v48, 0
    %v355 = vsel %vm293, %v49, 0
    %v358 = vsel %vm293, %v50, 0
    %v361 = vsel %vm293, %v51, 0
    %v364 = vsel %vm293, %v52, 0
    %v367 = vsel %vm293, %v53, 0
    %v370 = vsel %vm293, %v54, 0
    %v373 = vsel %vm293, %v55, 0
    %v376 = vsel %vm293, %v56, 0
    %v379 = vsel %vm293, %v57, 0
    %v382 = vsel %vm293, %v58, 0
    %v385 = vsel %vm293, %v59, 0
    %v388 = vsel %vm293, %v60, 0
    %v391 = vsel %vm293, %v61, 0
    %v394 = vsel %vm293, %v62, 0
    %v397 = vsel %vm293, %v63, 0
    %v400 = vsel %vm293, %v64, 0
    %v403 = vsel %vm293, %v65, 0
    %v406 = vsel %vm293, %v66, 0
    %v409 = vsel %vm293, %v67, 0
    %v412 = vsel %vm293, %v68, 0
    %v415 = vsel %vm293, %v69, 0
    %v418 = vsel %vm293, %v70, 0
    %v421 = vsel %vm293, %v71, 0
    %v424 = vsel %vm293, %v72, 0
    %v427 = vsel %vm293, %v73, 0
    %v430 = vsel %vm293, %v74, 0
    %v433 = vsel %vm293, %v75, 0
    %v436 = vsel %vm293, %v76, 0
    %v439 = vsel %vm293, %v77, 0
    %v442 = vsel %vm293, %v78, 0
    %v445 = vsel %vm293, %v79, 0
    %v448 = vsel %vm293, %v80, 0
    %v451 = vsel %vm293, %v81, 0
    %v454 = vsel %vm293, %v82, 0
    %v457 = vsel %vm293, %v83, 0
    %v460 = vsel %vm293, %v84, 0
    %v463 = vsel %vm293, %v85, 0
    %v466 = vsel %vm293, %v86, 0
    %v469 = vsel %vm293, %v87, 0
    %v472 = vsel %vm293, %v88, 0
    %v475 = vsel %vm293, %v89, 0
    %v478 = vsel %vm293, %v90, 0
    %v481 = vsel %vm293, %v91, 0
    %v484 = vsel %vm293, %v92, 0
    %v487 = vsel %vm293, %v93, 0
    %v490 = vsel %vm293, %v94, 0
    %v493 = vsel %vm293, %v95, 0
    %v496 = vsel %vm293, %v96, 0
    %v499 = vsel %vm293, %v97, 0
    %v502 = vsel %vm293, %v98, 0
    %v505 = vsel %vm293, %v99, 0
    %v508 = vsel %vm293, %v100, 0
    %v511 = vsel %vm293, %v101, 0
    %v514 = vsel %vm293, %v102, 0
    %v517 = vsel %vm293, %v103, 0
    %v520 = vsel %vm293, %v104, 0
    %v523 = vsel %vm293, %v105, 0
    %v526 = vsel %vm293, %v106, 0
    %v529 = vsel %vm293, %v107, 0
    %v532 = vsel %vm293, %v108, 0
    %v535 = vsel %vm293, %v109, 0
    %v538 = vsel %vm293, %v110, 0
    %v541 = vsel %vm293, %v111, 0
    %v544 = vsel %vm293, %v112, 0
    %v547 = vsel %vm293, %v113, 0
    %v550 = vsel %vm293, %v114, 0
    %v553 = vsel %vm293, %v115, 0
    %v556 = vsel %vm293, %v116, 0
    %v559 = vsel %vm293, %v117, 0
    %v562 = vsel %vm293, %v118, 0
    %v565 = vsel %vm293, %v119, 0
    %v568 = vsel %vm293, %v120, 0
    %v571 = vsel %vm293, %v121, 0
    %v574 = vsel %vm293, %v122, 0
    %v577 = vsel %vm293, %v123, 0
    %v580 = vsel %vm293, %v124, 0
    %v583 = vsel %vm293, %v125, 0
    %v586 = vsel %vm293, %v126, 0
    %v589 = vsel %vm293, %v127, 0
    %v592 = vsel %vm293, %v128, 0
    %v595 = vsel %vm293, %v129, 0
    %v598 = vsel %vm293, %v130, 0
    %v601 = vsel %vm293, %v131, 0
    %v604 = vsel %vm293, %v132, 0
    %v607 = vsel %vm293, %v133, 0
    %v610 = vsel %vm293, %v134, 0
    %v613 = vsel %vm293, %v135, 0
    %v616 = vsel %vm293, %v136, 0
    %v619 = vsel %vm293, %v137, 0
    %v622 = vsel %vm293, %v138, 0
    %v625 = vsel %vm293, %v139, 0
    %v628 = vsel %vm293, %v140, 0
    %v631 = vsel %vm293, %v141, 0
    %v634 = vsel %vm293, %v142, 0
    %v637 = vsel %vm293, %v143, 0
    %v640 = vsel %vm293, %v144, 0
    %v643 = vsel %vm293, %v145, 0
    %v646 = vsel %vm293, %v146, 0
    %v649 = vsel %vm293, %v147, 0
    %v652 = vsel %vm293, %v148, 0
    %v655 = vsel %vm293, %v149, 0
    %v658 = vsel %vm293, %v150, 0
    %v661 = vsel %vm293, %v151, 0
    %v664 = vsel %vm293, %v152, 0
    %v667 = vsel %vm293, %v153, 0
    %v670 = vsel %vm293, %v154, 0
    %v673 = vsel %vm293, %v155, 0
    %v676 = vsel %vm293, %v156, 0
    %v679 = vsel %vm293, %v157, 0
    %v682 = vsel %vm293, %v158, 0
    %v685 = vsel %vm293, %v159, 0
    %v688 = vsel %vm293, %v160, 0
    %v691 = vsel %vm293, %v161, 0
    %v694 = vsel %vm293, %v162, 0
    %v697 = vsel %vm293, %v163, 0
    %v700 = vsel %vm293, %v164, 0
    %v703 = vsel %vm293, %v165, 0
    %v706 = vsel %vm293, %v166, 0
    %v709 = vsel %vm293, %v167, 0
    %v712 = vsel %vm293, %v168, 0
    %v715 = vsel %vm293, %v169, 0
    %v718 = vsel %vm293, %v170, 0
    %v721 = vsel %vm293, %v171, 0
    %v724 = vsel %vm293, %v172, 0
    %v727 = vsel %vm293, %v173, 0
    %v730 = vsel %vm293, %v174, 0
    %v733 = vsel %vm293, %v175, 0
    %v736 = vsel %vm293, %v176, 0
    %v739 = vsel %vm293, %v177, 0
    %v742 = vsel %vm293, %v178, 0
    %v745 = vsel %vm293, %v179, 0
    %v748 = vsel %vm293, %v180, 0
    %v751 = vsel %vm293, %v181, 0
    %v754 = vsel %vm293, %v182, 0
    %v757 = vsel %vm293, %v183, 0
    %v760 = vsel %vm293, %v184, 0
    %v763 = vsel %vm293, %v185, 0
    %v766 = vsel %vm293, %v186, 0
    %v769 = vsel %vm293, %v187, 0
    %v772 = vsel %vm293, %v188, 0
    %v775 = vsel %vm293, %v189, 0
    %v778 = vsel %vm293, %v190, 0
    %v781 = vsel %vm293, %v191, 0
    %v784 = vsel %vm293, %v192, 0
    %v787 = vsel %vm293, %v193, 0
    %v790 = vsel %vm293, %v194, 0
    %v793 = vsel %vm293, %v195, 0
    %v796 = vsel %vm293, %v196, 0
    %v799 = vsel %vm293, %v197, 0
    %v802 = vsel %vm293, %v198, 0
    %v805 = vsel %vm293, %v199, 0
    %v808 = vsel %vm293, %v200, 0
    %v811 = vsel %vm293, %v201, 0
    %v814 = vsel %vm293, %v202, 0
    %v817 = vsel %vm293, %v203, 0
    %v820 = vsel %vm293, %v204, 0
    %v823 = vsel %vm293, %v205, 0
    %v826 = vsel %vm293, %v206, 0
    %v829 = vsel %vm293, %v207, 0
    %v832 = vsel %vm293, %v208, 0
    %v835 = vsel %vm293, %v209, 0
    %v838 = vsel %vm293, %v210, 0
    %v841 = vsel %vm293, %v211, 0
    %v844 = vsel %vm293, %v212, 0
    %v847 = vsel %vm293, %v213, 0
    %v850 = vsel %vm293, %v214, 0
    %v853 = vsel %vm293, %v215, 0
    %v856 = vsel %vm293, %v216, 0
    %v859 = vsel %vm293, %v217, 0
    %v862 = vsel %vm293, %v218, 0
    %v865 = vsel %vm293, %v219, 0
    %v868 = vsel %vm293, %v220, 0
    %v871 = vsel %vm293, %v221, 0
    %v874 = vsel %vm293, %v222, 0
    %v877 = vsel %vm293, %v223, 0
    %v880 = vsel %vm293, %v224, 0
    %v883 = vsel %vm293, %v225, 0
    %v886 = vsel %vm293, %v226, 0
    %v889 = vsel %vm293, %v227, 0
    %v892 = vsel %vm293, %v228, 0
    %v895 = vsel %vm293, %v229, 0
    %v898 = vsel %vm293, %v230, 0
    %v901 = vsel %vm293, %v231, 0
    %v904 = vsel %vm293, %v232, 0
    %v907 = vsel %vm293, %v233, 0
    %v910 = vsel %vm293, %v234, 0
    %v913 = vsel %vm293, %v235, 0
    %v916 = vsel %vm293, %v236, 0
    %v919 = vsel %vm293, %v237, 0
    %v922 = vsel %vm293, %v238, 0
    %v925 = vsel %vm293, %v239, 0
    %v928 = vsel %vm293, %v240, 0
    %v931 = vsel %vm293, %v241, 0
    %v934 = vsel %vm293, %v242, 0
    %v937 = vsel %vm293, %v243, 0
    %v940 = vsel %vm293, %v244, 0
    %v943 = vsel %vm293, %v245, 0
    %v946 = vsel %vm293, %v246, 0
    %v949 = vsel %vm293, %v247, 0
    %v952 = vsel %vm293, %v248, 0
    %v955 = vsel %vm293, %v249, 0
    %v958 = vsel %vm293, %v250, 0
    %v961 = vsel %vm293, %v251, 0
    %v964 = vsel %vm293, %v252, 0
    %v967 = vsel %vm293, %v253, 0
    %v970 = vsel %vm293, %v254, 0
    %v973 = vsel %vm293, %v255, 0
    %v976 = vsel %vm293, %v256, 0
    %v979 = vsel %vm293, %v257, 0
    %v982 = vsel %vm293, %v258, 0
    %v985 = vsel %vm293, %v259, 0
    %v988 = vsel %vm293, %v260, 0
    %v991 = vsel %vm293, %v261, 0
    %v994 = vsel %vm293, %v262, 0
    %v997 = vsel %vm293, %v263, 0
    %v1000 = vsel %vm293, %v264, 0
    %v1003 = vsel %vm293, %v265, 0
    %v1006 = vsel %vm293, %v266, 0
    %v1009 = vsel %vm293, %v267, 0
    %v1012 = vsel %vm293, %v268, 0
    %v1015 = vsel %vm293, %v269, 0
    %v1018 = vsel %vm293, %v270, 0
    %v1021 = vsel %vm293, %v271, 0
    %v1024 = vsel %vm293, %v272, 0
    %v1027 = vsel %vm293, %v273, 0
    %v1030 = vsel %vm293, %v274, 0
    %v1033 = vsel %vm293, %v275, 0
    %v1036 = vsel %vm293, %v276, 0
    %v1039 = vsel %vm293, %v277, 0
    %v1042 = vsel %vm293, %v278, 0
    %v1045 = vsel %vm293, %v279, 0
    %v1048 = vsel %vm293, %v280, 0
    %v1051 = vsel %vm293, %v281, 0
    %v1054 = vsel %vm293, %v282, 0
    %v1057 = vsel %vm293, %v283, 0
    %v1060 = vsel %vm293, %v284, 0
    %vm1062 = vcmask 1043456
    %v1064 = vsel %vm1062, %v285, 0
    %1066 = vmatprep.subr.mxu0 0.0
    %1067 = vmatpush1.msra.mxu0 %v1064
    %1068 = vmatprep.subr.mxu0 0.0
    %1069 = vmatpush1.msra.mxu0 0.0
    %1070 = vmatprep.subr.mxu0 0.0
    %1071 = vmatpush1.msra.mxu0 0.0
    %1072 = vmatprep.subr.mxu0 0.0
    %1073 = vmatpush1.msra.mxu0 0.0
    %1074 = vmatprep.subr.mxu0 0.0
    %1075 = vmatpush1.msra.mxu0 0.0
    %1076 = vmatprep.subr.mxu0 0.0
    %1077 = vmatpush1.msra.mxu0 0.0
    %1078 = vmatprep.subr.mxu0 0.0
    %1079 = vmatpush1.msra.mxu0 0.0
    %1080 = vmatprep.subr.mxu0 0.0
    %1081 = vmatpush1.msra.mxu0 0.0
    %1082 = vmatprep.subr.mxu0 0.0
    %1083 = vmatpush1.msra.mxu0 0.0
    %1084 = vmatprep.subr.mxu0 0.0
    %1085 = vmatpush1.msra.mxu0 0.0
    %1086 = vmatprep.subr.mxu0 0.0
    %1087 = vmatpush1.msra.mxu0 0.0
    %1088 = vmatprep.subr.mxu0 0.0
    %1089 = vmatpush1.msra.mxu0 0.0
    %1090 = vmatprep.subr.mxu0 0.0
    %1091 = vmatpush1.msra.mxu0 0.0
    %1092 = vmatprep.subr.mxu0 0.0
    %1093 = vmatpush1.msra.mxu0 0.0
    %1094 = vmatprep.subr.mxu0 0.0
    %1095 = vmatpush1.msra.mxu0 0.0
    %1096 = vmatprep.subr.mxu0 0.0
    %1097 = vmatpush1.msra.mxu0 0.0
    %1098 = vmatprep.subr.mxu0 0.0
    %1099 = vmatpush1.msra.mxu0 0.0
    %1100 = vmatprep.subr.mxu0 0.0
    %1101 = vmatpush1.msra.mxu0 0.0
    %1102 = vmatprep.subr.mxu0 0.0
    %1103 = vmatpush1.msra.mxu0 0.0
    %1104 = vmatprep.subr.mxu0 0.0
    %1105 = vmatpush1.msra.mxu0 0.0
    %1106 = vmatprep.subr.mxu0 0.0
    %1107 = vmatpush1.msra.mxu0 0.0
    %1108 = vmatprep.subr.mxu0 0.0
    %1109 = vmatpush1.msra.mxu0 0.0
    %1110 = vmatprep.subr.mxu0 0.0
    %1111 = vmatpush1.msra.mxu0 0.0
    %1112 = vmatprep.subr.mxu0 0.0
    %1113 = vmatpush1.msra.mxu0 0.0
    %1114 = vmatprep.subr.mxu0 0.0
    %1115 = vmatpush1.msra.mxu0 0.0
    %1116 = vmatprep.subr.mxu0 0.0
    %1117 = vmatpush1.msra.mxu0 0.0
    %1118 = vmatprep.subr.mxu0 0.0
    %1119 = vmatpush1.msra.mxu0 0.0
    %1120 = vmatprep.subr.mxu0 0.0
    %1121 = vmatpush1.msra.mxu0 0.0
    %1122 = vmatprep.subr.mxu0 0.0
    %1123 = vmatpush1.msra.mxu0 0.0
    %1124 = vmatprep.subr.mxu0 0.0
    %1125 = vmatpush1.msra.mxu0 0.0
    %1126 = vmatprep.subr.mxu0 0.0
    %1127 = vmatpush1.msra.mxu0 0.0
    %1128 = vmatprep.subr.mxu0 0.0
    %1129 = vmatpush1.msra.mxu0 0.0
    %1130 = vmatprep.mubr.f32.mxu0 0.0
    %1131 = vmatmul.mubr.f32.gmra.mrb[0].mxu0 %v295
    %v1132 = vpop.f32.mrb[0].mxu0
    %v1133 = vadd.f32 %v291, %v1132
    %v1134 = vpop.f32.mrb[0].mxu0
    %1135 = vmatprep.mubr.f32.mxu0 0.0
    %1136 = vmatmul.mubr.f32.gmra.mrb[0].mxu0 %v298
    %v1137 = vpop.f32.mrb[0].mxu0
    %v1138 = vadd.f32 %v291, %v1137
    %v1139 = vpop.f32.mrb[0].mxu0
    %1140 = vmatprep.mubr.f32.mxu0 0.0
    %1141 = vmatmul.mubr.f32.gmra.mrb[0].mxu0 %v301
    %v1142 = vpop.f32.mrb[0].mxu0
    %v1143 = vadd.f32 %v291, %v1142
    %v1144 = vpop.f32.mrb[0].mxu0
    %1145 = vmatprep.mubr.f32.mxu0 0.0
    %1146 = vmatmul.mubr.f32.gmra.mrb[0].mxu0 %v304
    %v1147 = vpop.f32.mrb[0].mxu0
    %v1148 = vadd.f32 %v291, %v1147
    %v1149 = vpop.f32.mrb[0].mxu0
    %1150 = vmatprep.mubr.f32.mxu0 0.0
    %1151 = vmatmul.mubr.f32.gmra.mrb[0].mxu0 %v307
    %v1152 = vpop.f32.mrb[0].mxu0
    %v1153 = vadd.f32 %v291, %v1152
    %v1154 = vpop.f32.mrb[0].mxu0
    %1155 = vmatprep.mubr.f32.mxu0 0.0
    %1156 = vmatmul.mubr.f32.gmra.mrb[0].mxu0 %v310
    %v1157 = vpop.f32.mrb[0].mxu0
    %v1158 = vadd.f32 %v291, %v1157
    %v1159 = vpop.f32.mrb[0].mxu0
    %1160 = vmatprep.mubr.f32.mxu0 0.0
    %1161 = vmatmul.mubr.f32.gmra.mrb[0].mxu0 %v313
    %v1162 = vpop.f32.mrb[0].mxu0
    %v1163 = vadd.f32 %v291, %v1162
    %v1164 = vpop.f32.mrb[0].mxu0
    %1165 = vmatprep.mubr.f32.mxu0 0.0
    %1166 = vmatmul.mubr.f32.gmra.mrb[0].mxu0 %v316
    %v1167 = vpop.f32.mrb[0].mxu0
    %v1168 = vadd.f32 %v291, %v1167
    %v1169 = vpop.f32.mrb[0].mxu0
    %1170 = vmatprep.mubr.f32.mxu0 0.0
    %1171 = vmatmul.mubr.f32.gmra.mrb[0].mxu0 %v319
    %v1172 = vpop.f32.mrb[0].mxu0
    %v1173 = vadd.f32 %v291, %v1172
    %v1174 = vpop.f32.mrb[0].mxu0
    %1175 = vmatprep.mubr.f32.mxu0 0.0
    %1176 = vmatmul.mubr.f32.gmra.mrb[0].mxu0 %v322
    %v1177 = vpop.f32.mrb[0].mxu0
    %v1178 = vadd.f32 %v291, %v1177
    %v1179 = vpop.f32.mrb[0].mxu0
    %1180 = vmatprep.mubr.f32.mxu0 0.0
    %1181 = vmatmul.mubr.f32.gmra.mrb[0].mxu0 %v325
    %v1182 = vpop.f32.mrb[0].mxu0
    %v1183 = vadd.f32 %v291, %v1182
    %v1184 = vpop.f32.mrb[0].mxu0
    %1185 = vmatprep.mubr.f32.mxu0 0.0
    %1186 = vmatmul.mubr.f32.gmra.mrb[0].mxu0 %v328
    %v1187 = vpop.f32.mrb[0].mxu0
    %v1188 = vadd.f32 %v291, %v1187
    %v1189 = vpop.f32.mrb[0].mxu0
    %1190 = vmatprep.mubr.f32.mxu0 0.0
    %1191 = vmatmul.mubr.f32.gmra.mrb[0].mxu0 %v331
    %v1192 = vpop.f32.mrb[0].mxu0
    %v1193 = vadd.f32 %v291, %v1192
    %v1194 = vpop.f32.mrb[0].mxu0
    %1195 = vmatprep.mubr.f32.mxu0 0.0
    %1196 = vmatmul.mubr.f32.gmra.mrb[0].mxu0 %v334
    %v1197 = vpop.f32.mrb[0].mxu0
    %v1198 = vadd.f32 %v291, %v1197
    %v1199 = vpop.f32.mrb[0].mxu0
    %1200 = vmatprep.mubr.f32.mxu0 0.0
    %1201 = vmatmul.mubr.f32.gmra.mrb[0].mxu0 %v337
    %v1202 = vpop.f32.mrb[0].mxu0
    %v1203 = vadd.f32 %v291, %v1202
    %v1204 = vpop.f32.mrb[0].mxu0
    %1205 = vmatprep.mubr.f32.mxu0 0.0
    %1206 = vmatmul.mubr.f32.gmra.mrb[0].mxu0 %v340
    %v1207 = vpop.f32.mrb[0].mxu0
    %v1208 = vadd.f32 %v291, %v1207
    %v1209 = vpop.f32.mrb[0].mxu0
    %1210 = vmatprep.mubr.f32.mxu0 0.0
    %1211 = vmatmul.mubr.f32.gmra.mrb[0].mxu0 %v343
    %v1212 = vpop.f32.mrb[0].mxu0
    %v1213 = vadd.f32 %v291, %v1212
    %v1214 = vpop.f32.mrb[0].mxu0
    %1215 = vmatprep.mubr.f32.mxu0 0.0
    %1216 = vmatmul.mubr.f32.gmra.mrb[0].mxu0 %v346
    %v1217 = vpop.f32.mrb[0].mxu0
    %v1218 = vadd.f32 %v291, %v1217
    %v1219 = vpop.f32.mrb[0].mxu0
    %1220 = vmatprep.mubr.f32.mxu0 0.0
    %1221 = vmatmul.mubr.f32.gmra.mrb[0].mxu0 %v349
    %v1222 = vpop.f32.mrb[0].mxu0
    %v1223 = vadd.f32 %v291, %v1222
    %v1224 = vpop.f32.mrb[0].mxu0
    %1225 = vmatprep.mubr.f32.mxu0 0.0
    %1226 = vmatmul.mubr.f32.gmra.mrb[0].mxu0 %v352
    %v1227 = vpop.f32.mrb[0].mxu0
    %v1228 = vadd.f32 %v291, %v1227
    %v1229 = vpop.f32.mrb[0].mxu0
    %1230 = vmatprep.mubr.f32.mxu0 0.0
    %1231 = vmatmul.mubr.f32.gmra.mrb[0].mxu0 %v355
    %v1232 = vpop.f32.mrb[0].mxu0
    %v1233 = vadd.f32 %v291, %v1232
    %v1234 = vpop.f32.mrb[0].mxu0
    %1235 = vmatprep.mubr.f32.mxu0 0.0
    %1236 = vmatmul.mubr.f32.gmra.mrb[0].mxu0 %v358
    %v1237 = vpop.f32.mrb[0].mxu0
    %v1238 = vadd.f32 %v291, %v1237
    %v1239 = vpop.f32.mrb[0].mxu0
    %1240 = vmatprep.mubr.f32.mxu0 0.0
    %1241 = vmatmul.mubr.f32.gmra.mrb[0].mxu0 %v361
    %v1242 = vpop.f32.mrb[0].mxu0
    %v1243 = vadd.f32 %v291, %v1242
    %v1244 = vpop.f32.mrb[0].mxu0
    %1245 = vmatprep.mubr.f32.mxu0 0.0
    %1246 = vmatmul.mubr.f32.gmra.mrb[0].mxu0 %v364
    %v1247 = vpop.f32.mrb[0].mxu0
    %v1248 = vadd.f32 %v291, %v1247
    %v1249 = vpop.f32.mrb[0].mxu0
    %1250 = vmatprep.mubr.f32.mxu0 0.0
    %1251 = vmatmul.mubr.f32.gmra.mrb[0].mxu0 %v367
    %v1252 = vpop.f32.mrb[0].mxu0
    %v1253 = vadd.f32 %v291, %v1252
    %v1254 = vpop.f32.mrb[0].mxu0
    %1255 = vmatprep.mubr.f32.mxu0 0.0
    %1256 = vmatmul.mubr.f32.gmra.mrb[0].mxu0 %v370
    %v1257 = vpop.f32.mrb[0].mxu0
    %v1258 = vadd.f32 %v291, %v1257
    %v1259 = vpop.f32.mrb[0].mxu0
    %1260 = vmatprep.mubr.f32.mxu0 0.0
    %1261 = vmatmul.mubr.f32.gmra.mrb[0].mxu0 %v373
    %v1262 = vpop.f32.mrb[0].mxu0
    %v1263 = vadd.f32 %v291, %v1262
    %v1264 = vpop.f32.mrb[0].mxu0
    %1265 = vmatprep.mubr.f32.mxu0 0.0
    %1266 = vmatmul.mubr.f32.gmra.mrb[0].mxu0 %v376
    %v1267 = vpop.f32.mrb[0].mxu0
    %v1268 = vadd.f32 %v291, %v1267
    %v1269 = vpop.f32.mrb[0].mxu0
    %1270 = vmatprep.mubr.f32.mxu0 0.0
    %1271 = vmatmul.mubr.f32.gmra.mrb[0].mxu0 %v379
    %v1272 = vpop.f32.mrb[0].mxu0
    %v1273 = vadd.f32 %v291, %v1272
    %v1274 = vpop.f32.mrb[0].mxu0
    %1275 = vmatprep.mubr.f32.mxu0 0.0
    %1276 = vmatmul.mubr.f32.gmra.mrb[0].mxu0 %v382
    %v1277 = vpop.f32.mrb[0].mxu0
    %v1278 = vadd.f32 %v291, %v1277
    %v1279 = vpop.f32.mrb[0].mxu0
    %1280 = vmatprep.mubr.f32.mxu0 0.0
    %1281 = vmatmul.mubr.f32.gmra.mrb[0].mxu0 %v385
    %v1282 = vpop.f32.mrb[0].mxu0
    %v1283 = vadd.f32 %v291, %v1282
    %v1284 = vpop.f32.mrb[0].mxu0
    %1285 = vmatprep.mubr.f32.mxu0 0.0
    %1286 = vmatmul.mubr.f32.gmra.mrb[0].mxu0 %v388
    %v1287 = vpop.f32.mrb[0].mxu0
    %v1288 = vadd.f32 %v291, %v1287
    %v1289 = vpop.f32.mrb[0].mxu0
    %1290 = vmatprep.mubr.f32.mxu0 0.0
    %1291 = vmatmul.mubr.f32.gmra.mrb[0].mxu0 %v391
    %v1292 = vpop.f32.mrb[0].mxu0
    %v1293 = vadd.f32 %v291, %v1292
    %v1294 = vpop.f32.mrb[0].mxu0
    %1295 = vmatprep.mubr.f32.mxu0 0.0
    %1296 = vmatmul.mubr.f32.gmra.mrb[0].mxu0 %v394
    %v1297 = vpop.f32.mrb[0].mxu0
    %v1298 = vadd.f32 %v291, %v1297
    %v1299 = vpop.f32.mrb[0].mxu0
    %1300 = vmatprep.mubr.f32.mxu0 0.0
    %1301 = vmatmul.mubr.f32.gmra.mrb[0].mxu0 %v397
    %v1302 = vpop.f32.mrb[0].mxu0
    %v1303 = vadd.f32 %v291, %v1302
    %v1304 = vpop.f32.mrb[0].mxu0
    %1305 = vmatprep.mubr.f32.mxu0 0.0
    %1306 = vmatmul.mubr.f32.gmra.mrb[0].mxu0 %v400
    %v1307 = vpop.f32.mrb[0].mxu0
    %v1308 = vadd.f32 %v291, %v1307
    %v1309 = vpop.f32.mrb[0].mxu0
    %1310 = vmatprep.mubr.f32.mxu0 0.0
    %1311 = vmatmul.mubr.f32.gmra.mrb[0].mxu0 %v403
    %v1312 = vpop.f32.mrb[0].mxu0
    %v1313 = vadd.f32 %v291, %v1312
    %v1314 = vpop.f32.mrb[0].mxu0
    %1315 = vmatprep.mubr.f32.mxu0 0.0
    %1316 = vmatmul.mubr.f32.gmra.mrb[0].mxu0 %v406
    %v1317 = vpop.f32.mrb[0].mxu0
    %v1318 = vadd.f32 %v291, %v1317
    %v1319 = vpop.f32.mrb[0].mxu0
    %1320 = vmatprep.mubr.f32.mxu0 0.0
    %1321 = vmatmul.mubr.f32.gmra.mrb[0].mxu0 %v409
    %v1322 = vpop.f32.mrb[0].mxu0
    %v1323 = vadd.f32 %v291, %v1322
    %v1324 = vpop.f32.mrb[0].mxu0
    %1325 = vmatprep.mubr.f32.mxu0 0.0
    %1326 = vmatmul.mubr.f32.gmra.mrb[0].mxu0 %v412
    %v1327 = vpop.f32.mrb[0].mxu0
    %v1328 = vadd.f32 %v291, %v1327
    %v1329 = vpop.f32.mrb[0].mxu0
    %1330 = vmatprep.mubr.f32.mxu0 0.0
    %1331 = vmatmul.mubr.f32.gmra.mrb[0].mxu0 %v415
    %v1332 = vpop.f32.mrb[0].mxu0
    %v1333 = vadd.f32 %v291, %v1332
    %v1334 = vpop.f32.mrb[0].mxu0
    %1335 = vmatprep.mubr.f32.mxu0 0.0
    %1336 = vmatmul.mubr.f32.gmra.mrb[0].mxu0 %v418
    %v1337 = vpop.f32.mrb[0].mxu0
    %v1338 = vadd.f32 %v291, %v1337
    %v1339 = vpop.f32.mrb[0].mxu0
    %1340 = vmatprep.mubr.f32.mxu0 0.0
    %1341 = vmatmul.mubr.f32.gmra.mrb[0].mxu0 %v421
    %v1342 = vpop.f32.mrb[0].mxu0
    %v1343 = vadd.f32 %v291, %v1342
    %v1344 = vpop.f32.mrb[0].mxu0
    %1345 = vmatprep.mubr.f32.mxu0 0.0
    %1346 = vmatmul.mubr.f32.gmra.mrb[0].mxu0 %v424
    %v1347 = vpop.f32.mrb[0].mxu0
    %v1348 = vadd.f32 %v291, %v1347
    %v1349 = vpop.f32.mrb[0].mxu0
    %1350 = vmatprep.mubr.f32.mxu0 0.0
    %1351 = vmatmul.mubr.f32.gmra.mrb[0].mxu0 %v427
    %v1352 = vpop.f32.mrb[0].mxu0
    %v1353 = vadd.f32 %v291, %v1352
    %v1354 = vpop.f32.mrb[0].mxu0
    %1355 = vmatprep.mubr.f32.mxu0 0.0
    %1356 = vmatmul.mubr.f32.gmra.mrb[0].mxu0 %v430
    %v1357 = vpop.f32.mrb[0].mxu0
    %v1358 = vadd.f32 %v291, %v1357
    %v1359 = vpop.f32.mrb[0].mxu0
    %1360 = vmatprep.mubr.f32.mxu0 0.0
    %1361 = vmatmul.mubr.f32.gmra.mrb[0].mxu0 %v433
    %v1362 = vpop.f32.mrb[0].mxu0
    %v1363 = vadd.f32 %v291, %v1362
    %v1364 = vpop.f32.mrb[0].mxu0
    %1365 = vmatprep.mubr.f32.mxu0 0.0
    %1366 = vmatmul.mubr.f32.gmra.mrb[0].mxu0 %v436
    %v1367 = vpop.f32.mrb[0].mxu0
    %v1368 = vadd.f32 %v291, %v1367
    %v1369 = vpop.f32.mrb[0].mxu0
    %1370 = vmatprep.mubr.f32.mxu0 0.0
    %1371 = vmatmul.mubr.f32.gmra.mrb[0].mxu0 %v439
    %v1372 = vpop.f32.mrb[0].mxu0
    %v1373 = vadd.f32 %v291, %v1372
    %v1374 = vpop.f32.mrb[0].mxu0
    %1375 = vmatprep.mubr.f32.mxu0 0.0
    %1376 = vmatmul.mubr.f32.gmra.mrb[0].mxu0 %v442
    %v1377 = vpop.f32.mrb[0].mxu0
    %v1378 = vadd.f32 %v291, %v1377
    %v1379 = vpop.f32.mrb[0].mxu0
    %1380 = vmatprep.mubr.f32.mxu0 0.0
    %1381 = vmatmul.mubr.f32.gmra.mrb[0].mxu0 %v445
    %v1382 = vpop.f32.mrb[0].mxu0
    %v1383 = vadd.f32 %v291, %v1382
    %v1384 = vpop.f32.mrb[0].mxu0
    %1385 = vmatprep.mubr.f32.mxu0 0.0
    %1386 = vmatmul.mubr.f32.gmra.mrb[0].mxu0 %v448
    %v1387 = vpop.f32.mrb[0].mxu0
    %v1388 = vadd.f32 %v291, %v1387
    %v1389 = vpop.f32.mrb[0].mxu0
    %1390 = vmatprep.mubr.f32.mxu0 0.0
    %1391 = vmatmul.mubr.f32.gmra.mrb[0].mxu0 %v451
    %v1392 = vpop.f32.mrb[0].mxu0
    %v1393 = vadd.f32 %v291, %v1392
    %v1394 = vpop.f32.mrb[0].mxu0
    %1395 = vmatprep.mubr.f32.mxu0 0.0
    %1396 = vmatmul.mubr.f32.gmra.mrb[0].mxu0 %v454
    %v1397 = vpop.f32.mrb[0].mxu0
    %v1398 = vadd.f32 %v291, %v1397
    %v1399 = vpop.f32.mrb[0].mxu0
    %1400 = vmatprep.mubr.f32.mxu0 0.0
    %1401 = vmatmul.mubr.f32.gmra.mrb[0].mxu0 %v457
    %v1402 = vpop.f32.mrb[0].mxu0
    %v1403 = vadd.f32 %v291, %v1402
    %v1404 = vpop.f32.mrb[0].mxu0
    %1405 = vmatprep.mubr.f32.mxu0 0.0
    %1406 = vmatmul.mubr.f32.gmra.mrb[0].mxu0 %v460
    %v1407 = vpop.f32.mrb[0].mxu0
    %v1408 = vadd.f32 %v291, %v1407
    %v1409 = vpop.f32.mrb[0].mxu0
    %1410 = vmatprep.mubr.f32.mxu0 0.0
    %1411 = vmatmul.mubr.f32.gmra.mrb[0].mxu0 %v463
    %v1412 = vpop.f32.mrb[0].mxu0
    %v1413 = vadd.f32 %v291, %v1412
    %v1414 = vpop.f32.mrb[0].mxu0
    %1415 = vmatprep.mubr.f32.mxu0 0.0
    %1416 = vmatmul.mubr.f32.gmra.mrb[0].mxu0 %v466
    %v1417 = vpop.f32.mrb[0].mxu0
    %v1418 = vadd.f32 %v291, %v1417
    %v1419 = vpop.f32.mrb[0].mxu0
    %1420 = vmatprep.mubr.f32.mxu0 0.0
    %1421 = vmatmul.mubr.f32.gmra.mrb[0].mxu0 %v469
    %v1422 = vpop.f32.mrb[0].mxu0
    %v1423 = vadd.f32 %v291, %v1422
    %v1424 = vpop.f32.mrb[0].mxu0
    %1425 = vmatprep.mubr.f32.mxu0 0.0
    %1426 = vmatmul.mubr.f32.gmra.mrb[0].mxu0 %v472
    %v1427 = vpop.f32.mrb[0].mxu0
    %v1428 = vadd.f32 %v291, %v1427
    %v1429 = vpop.f32.mrb[0].mxu0
    %1430 = vmatprep.mubr.f32.mxu0 0.0
    %1431 = vmatmul.mubr.f32.gmra.mrb[0].mxu0 %v475
    %v1432 = vpop.f32.mrb[0].mxu0
    %v1433 = vadd.f32 %v291, %v1432
    %v1434 = vpop.f32.mrb[0].mxu0
    %1435 = vmatprep.mubr.f32.mxu0 0.0
    %1436 = vmatmul.mubr.f32.gmra.mrb[0].mxu0 %v478
    %v1437 = vpop.f32.mrb[0].mxu0
    %v1438 = vadd.f32 %v291, %v1437
    %v1439 = vpop.f32.mrb[0].mxu0
    %1440 = vmatprep.mubr.f32.mxu0 0.0
    %1441 = vmatmul.mubr.f32.gmra.mrb[0].mxu0 %v481
    %v1442 = vpop.f32.mrb[0].mxu0
    %v1443 = vadd.f32 %v291, %v1442
    %v1444 = vpop.f32.mrb[0].mxu0
    %1445 = vmatprep.mubr.f32.mxu0 0.0
    %1446 = vmatmul.mubr.f32.gmra.mrb[0].mxu0 %v484
    %v1447 = vpop.f32.mrb[0].mxu0
    %v1448 = vadd.f32 %v291, %v1447
    %v1449 = vpop.f32.mrb[0].mxu0
    %1450 = vmatprep.mubr.f32.mxu0 0.0
    %1451 = vmatmul.mubr.f32.gmra.mrb[0].mxu0 %v487
    %v1452 = vpop.f32.mrb[0].mxu0
    %v1453 = vadd.f32 %v291, %v1452
    %v1454 = vpop.f32.mrb[0].mxu0
    %1455 = vmatprep.mubr.f32.mxu0 0.0
    %1456 = vmatmul.mubr.f32.gmra.mrb[0].mxu0 %v490
    %v1457 = vpop.f32.mrb[0].mxu0
    %v1458 = vadd.f32 %v291, %v1457
    %v1459 = vpop.f32.mrb[0].mxu0
    %1460 = vmatprep.mubr.f32.mxu0 0.0
    %1461 = vmatmul.mubr.f32.gmra.mrb[0].mxu0 %v493
    %v1462 = vpop.f32.mrb[0].mxu0
    %v1463 = vadd.f32 %v291, %v1462
    %v1464 = vpop.f32.mrb[0].mxu0
    %1465 = vmatprep.mubr.f32.mxu0 0.0
    %1466 = vmatmul.mubr.f32.gmra.mrb[0].mxu0 %v496
    %v1467 = vpop.f32.mrb[0].mxu0
    %v1468 = vadd.f32 %v291, %v1467
    %v1469 = vpop.f32.mrb[0].mxu0
    %1470 = vmatprep.mubr.f32.mxu0 0.0
    %1471 = vmatmul.mubr.f32.gmra.mrb[0].mxu0 %v499
    %v1472 = vpop.f32.mrb[0].mxu0
    %v1473 = vadd.f32 %v291, %v1472
    %v1474 = vpop.f32.mrb[0].mxu0
    %1475 = vmatprep.mubr.f32.mxu0 0.0
    %1476 = vmatmul.mubr.f32.gmra.mrb[0].mxu0 %v502
    %v1477 = vpop.f32.mrb[0].mxu0
    %v1478 = vadd.f32 %v291, %v1477
    %v1479 = vpop.f32.mrb[0].mxu0
    %1480 = vmatprep.mubr.f32.mxu0 0.0
    %1481 = vmatmul.mubr.f32.gmra.mrb[0].mxu0 %v505
    %v1482 = vpop.f32.mrb[0].mxu0
    %v1483 = vadd.f32 %v291, %v1482
    %v1484 = vpop.f32.mrb[0].mxu0
    %1485 = vmatprep.mubr.f32.mxu0 0.0
    %1486 = vmatmul.mubr.f32.gmra.mrb[0].mxu0 %v508
    %v1487 = vpop.f32.mrb[0].mxu0
    %v1488 = vadd.f32 %v291, %v1487
    %v1489 = vpop.f32.mrb[0].mxu0
    %1490 = vmatprep.mubr.f32.mxu0 0.0
    %1491 = vmatmul.mubr.f32.gmra.mrb[0].mxu0 %v511
    %v1492 = vpop.f32.mrb[0].mxu0
    %v1493 = vadd.f32 %v291, %v1492
    %v1494 = vpop.f32.mrb[0].mxu0
    %1495 = vmatprep.mubr.f32.mxu0 0.0
    %1496 = vmatmul.mubr.f32.gmra.mrb[0].mxu0 %v514
    %v1497 = vpop.f32.mrb[0].mxu0
    %v1498 = vadd.f32 %v291, %v1497
    %v1499 = vpop.f32.mrb[0].mxu0
    %1500 = vmatprep.mubr.f32.mxu0 0.0
    %1501 = vmatmul.mubr.f32.gmra.mrb[0].mxu0 %v517
    %v1502 = vpop.f32.mrb[0].mxu0
    %v1503 = vadd.f32 %v291, %v1502
    %v1504 = vpop.f32.mrb[0].mxu0
    %1505 = vmatprep.mubr.f32.mxu0 0.0
    %1506 = vmatmul.mubr.f32.gmra.mrb[0].mxu0 %v520
    %v1507 = vpop.f32.mrb[0].mxu0
    %v1508 = vadd.f32 %v291, %v1507
    %v1509 = vpop.f32.mrb[0].mxu0
    %1510 = vmatprep.mubr.f32.mxu0 0.0
    %1511 = vmatmul.mubr.f32.gmra.mrb[0].mxu0 %v523
    %v1512 = vpop.f32.mrb[0].mxu0
    %v1513 = vadd.f32 %v291, %v1512
    %v1514 = vpop.f32.mrb[0].mxu0
    %1515 = vmatprep.mubr.f32.mxu0 0.0
    %1516 = vmatmul.mubr.f32.gmra.mrb[0].mxu0 %v526
    %v1517 = vpop.f32.mrb[0].mxu0
    %v1518 = vadd.f32 %v291, %v1517
    %v1519 = vpop.f32.mrb[0].mxu0
    %1520 = vmatprep.mubr.f32.mxu0 0.0
    %1521 = vmatmul.mubr.f32.gmra.mrb[0].mxu0 %v529
    %v1522 = vpop.f32.mrb[0].mxu0
    %v1523 = vadd.f32 %v291, %v1522
    %v1524 = vpop.f32.mrb[0].mxu0
    %1525 = vmatprep.mubr.f32.mxu0 0.0
    %1526 = vmatmul.mubr.f32.gmra.mrb[0].mxu0 %v532
    %v1527 = vpop.f32.mrb[0].mxu0
    %v1528 = vadd.f32 %v291, %v1527
    %v1529 = vpop.f32.mrb[0].mxu0
    %1530 = vmatprep.mubr.f32.mxu0 0.0
    %1531 = vmatmul.mubr.f32.gmra.mrb[0].mxu0 %v535
    %v1532 = vpop.f32.mrb[0].mxu0
    %v1533 = vadd.f32 %v291, %v1532
    %v1534 = vpop.f32.mrb[0].mxu0
    %1535 = vmatprep.mubr.f32.mxu0 0.0
    %1536 = vmatmul.mubr.f32.gmra.mrb[0].mxu0 %v538
    %v1537 = vpop.f32.mrb[0].mxu0
    %v1538 = vadd.f32 %v291, %v1537
    %v1539 = vpop.f32.mrb[0].mxu0
    %1540 = vmatprep.mubr.f32.mxu0 0.0
    %1541 = vmatmul.mubr.f32.gmra.mrb[0].mxu0 %v541
    %v1542 = vpop.f32.mrb[0].mxu0
    %v1543 = vadd.f32 %v291, %v1542
    %v1544 = vpop.f32.mrb[0].mxu0
    %1545 = vmatprep.mubr.f32.mxu0 0.0
    %1546 = vmatmul.mubr.f32.gmra.mrb[0].mxu0 %v544
    %v1547 = vpop.f32.mrb[0].mxu0
    %v1548 = vadd.f32 %v291, %v1547
    %v1549 = vpop.f32.mrb[0].mxu0
    %1550 = vmatprep.mubr.f32.mxu0 0.0
    %1551 = vmatmul.mubr.f32.gmra.mrb[0].mxu0 %v547
    %v1552 = vpop.f32.mrb[0].mxu0
    %v1553 = vadd.f32 %v291, %v1552
    %v1554 = vpop.f32.mrb[0].mxu0
    %1555 = vmatprep.mubr.f32.mxu0 0.0
    %1556 = vmatmul.mubr.f32.gmra.mrb[0].mxu0 %v550
    %v1557 = vpop.f32.mrb[0].mxu0
    %v1558 = vadd.f32 %v291, %v1557
    %v1559 = vpop.f32.mrb[0].mxu0
    %1560 = vmatprep.mubr.f32.mxu0 0.0
    %1561 = vmatmul.mubr.f32.gmra.mrb[0].mxu0 %v553
    %v1562 = vpop.f32.mrb[0].mxu0
    %v1563 = vadd.f32 %v291, %v1562
    %v1564 = vpop.f32.mrb[0].mxu0
    %1565 = vmatprep.mubr.f32.mxu0 0.0
    %1566 = vmatmul.mubr.f32.gmra.mrb[0].mxu0 %v556
    %v1567 = vpop.f32.mrb[0].mxu0
    %v1568 = vadd.f32 %v291, %v1567
    %v1569 = vpop.f32.mrb[0].mxu0
    %1570 = vmatprep.mubr.f32.mxu0 0.0
    %1571 = vmatmul.mubr.f32.gmra.mrb[0].mxu0 %v559
    %v1572 = vpop.f32.mrb[0].mxu0
    %v1573 = vadd.f32 %v291, %v1572
    %v1574 = vpop.f32.mrb[0].mxu0
    %1575 = vmatprep.mubr.f32.mxu0 0.0
    %1576 = vmatmul.mubr.f32.gmra.mrb[0].mxu0 %v562
    %v1577 = vpop.f32.mrb[0].mxu0
    %v1578 = vadd.f32 %v291, %v1577
    %v1579 = vpop.f32.mrb[0].mxu0
    %1580 = vmatprep.mubr.f32.mxu0 0.0
    %1581 = vmatmul.mubr.f32.gmra.mrb[0].mxu0 %v565
    %v1582 = vpop.f32.mrb[0].mxu0
    %v1583 = vadd.f32 %v291, %v1582
    %v1584 = vpop.f32.mrb[0].mxu0
    %1585 = vmatprep.mubr.f32.mxu0 0.0
    %1586 = vmatmul.mubr.f32.gmra.mrb[0].mxu0 %v568
    %v1587 = vpop.f32.mrb[0].mxu0
    %v1588 = vadd.f32 %v291, %v1587
    %v1589 = vpop.f32.mrb[0].mxu0
    %1590 = vmatprep.mubr.f32.mxu0 0.0
    %1591 = vmatmul.mubr.f32.gmra.mrb[0].mxu0 %v571
    %v1592 = vpop.f32.mrb[0].mxu0
    %v1593 = vadd.f32 %v291, %v1592
    %v1594 = vpop.f32.mrb[0].mxu0
    %1595 = vmatprep.mubr.f32.mxu0 0.0
    %1596 = vmatmul.mubr.f32.gmra.mrb[0].mxu0 %v574
    %v1597 = vpop.f32.mrb[0].mxu0
    %v1598 = vadd.f32 %v291, %v1597
    %v1599 = vpop.f32.mrb[0].mxu0
    %1600 = vmatprep.mubr.f32.mxu0 0.0
    %1601 = vmatmul.mubr.f32.gmra.mrb[0].mxu0 %v577
    %v1602 = vpop.f32.mrb[0].mxu0
    %v1603 = vadd.f32 %v291, %v1602
    %v1604 = vpop.f32.mrb[0].mxu0
    %1605 = vmatprep.mubr.f32.mxu0 0.0
    %1606 = vmatmul.mubr.f32.gmra.mrb[0].mxu0 %v580
    %v1607 = vpop.f32.mrb[0].mxu0
    %v1608 = vadd.f32 %v291, %v1607
    %v1609 = vpop.f32.mrb[0].mxu0
    %1610 = vmatprep.mubr.f32.mxu0 0.0
    %1611 = vmatmul.mubr.f32.gmra.mrb[0].mxu0 %v583
    %v1612 = vpop.f32.mrb[0].mxu0
    %v1613 = vadd.f32 %v291, %v1612
    %v1614 = vpop.f32.mrb[0].mxu0
    %1615 = vmatprep.mubr.f32.mxu0 0.0
    %1616 = vmatmul.mubr.f32.gmra.mrb[0].mxu0 %v586
    %v1617 = vpop.f32.mrb[0].mxu0
    %v1618 = vadd.f32 %v291, %v1617
    %v1619 = vpop.f32.mrb[0].mxu0
    %1620 = vmatprep.mubr.f32.mxu0 0.0
    %1621 = vmatmul.mubr.f32.gmra.mrb[0].mxu0 %v589
    %v1622 = vpop.f32.mrb[0].mxu0
    %v1623 = vadd.f32 %v291, %v1622
    %v1624 = vpop.f32.mrb[0].mxu0
    %1625 = vmatprep.mubr.f32.mxu0 0.0
    %1626 = vmatmul.mubr.f32.gmra.mrb[0].mxu0 %v592
    %v1627 = vpop.f32.mrb[0].mxu0
    %v1628 = vadd.f32 %v291, %v1627
    %v1629 = vpop.f32.mrb[0].mxu0
    %1630 = vmatprep.mubr.f32.mxu0 0.0
    %1631 = vmatmul.mubr.f32.gmra.mrb[0].mxu0 %v595
    %v1632 = vpop.f32.mrb[0].mxu0
    %v1633 = vadd.f32 %v291, %v1632
    %v1634 = vpop.f32.mrb[0].mxu0
    %1635 = vmatprep.mubr.f32.mxu0 0.0
    %1636 = vmatmul.mubr.f32.gmra.mrb[0].mxu0 %v598
    %v1637 = vpop.f32.mrb[0].mxu0
    %v1638 = vadd.f32 %v291, %v1637
    %v1639 = vpop.f32.mrb[0].mxu0
    %1640 = vmatprep.mubr.f32.mxu0 0.0
    %1641 = vmatmul.mubr.f32.gmra.mrb[0].mxu0 %v601
    %v1642 = vpop.f32.mrb[0].mxu0
    %v1643 = vadd.f32 %v291, %v1642
    %v1644 = vpop.f32.mrb[0].mxu0
    %1645 = vmatprep.mubr.f32.mxu0 0.0
    %1646 = vmatmul.mubr.f32.gmra.mrb[0].mxu0 %v604
    %v1647 = vpop.f32.mrb[0].mxu0
    %v1648 = vadd.f32 %v291, %v1647
    %v1649 = vpop.f32.mrb[0].mxu0
    %1650 = vmatprep.mubr.f32.mxu0 0.0
    %1651 = vmatmul.mubr.f32.gmra.mrb[0].mxu0 %v607
    %v1652 = vpop.f32.mrb[0].mxu0
    %v1653 = vadd.f32 %v291, %v1652
    %v1654 = vpop.f32.mrb[0].mxu0
    %1655 = vmatprep.mubr.f32.mxu0 0.0
    %1656 = vmatmul.mubr.f32.gmra.mrb[0].mxu0 %v610
    %v1657 = vpop.f32.mrb[0].mxu0
    %v1658 = vadd.f32 %v291, %v1657
    %v1659 = vpop.f32.mrb[0].mxu0
    %1660 = vmatprep.mubr.f32.mxu0 0.0
    %1661 = vmatmul.mubr.f32.gmra.mrb[0].mxu0 %v613
    %v1662 = vpop.f32.mrb[0].mxu0
    %v1663 = vadd.f32 %v291, %v1662
    %v1664 = vpop.f32.mrb[0].mxu0
    %1665 = vmatprep.mubr.f32.mxu0 0.0
    %1666 = vmatmul.mubr.f32.gmra.mrb[0].mxu0 %v616
    %v1667 = vpop.f32.mrb[0].mxu0
    %v1668 = vadd.f32 %v291, %v1667
    %v1669 = vpop.f32.mrb[0].mxu0
    %1670 = vmatprep.mubr.f32.mxu0 0.0
    %1671 = vmatmul.mubr.f32.gmra.mrb[0].mxu0 %v619
    %v1672 = vpop.f32.mrb[0].mxu0
    %v1673 = vadd.f32 %v291, %v1672
    %v1674 = vpop.f32.mrb[0].mxu0
    %1675 = vmatprep.mubr.f32.mxu0 0.0
    %1676 = vmatmul.mubr.f32.gmra.mrb[0].mxu0 %v622
    %v1677 = vpop.f32.mrb[0].mxu0
    %v1678 = vadd.f32 %v291, %v1677
    %v1679 = vpop.f32.mrb[0].mxu0
    %1680 = vmatprep.mubr.f32.mxu0 0.0
    %1681 = vmatmul.mubr.f32.gmra.mrb[0].mxu0 %v625
    %v1682 = vpop.f32.mrb[0].mxu0
    %v1683 = vadd.f32 %v291, %v1682
    %v1684 = vpop.f32.mrb[0].mxu0
    %1685 = vmatprep.mubr.f32.mxu0 0.0
    %1686 = vmatmul.mubr.f32.gmra.mrb[0].mxu0 %v628
    %v1687 = vpop.f32.mrb[0].mxu0
    %v1688 = vadd.f32 %v291, %v1687
    %v1689 = vpop.f32.mrb[0].mxu0
    %1690 = vmatprep.mubr.f32.mxu0 0.0
    %1691 = vmatmul.mubr.f32.gmra.mrb[0].mxu0 %v631
    %v1692 = vpop.f32.mrb[0].mxu0
    %v1693 = vadd.f32 %v291, %v1692
    %v1694 = vpop.f32.mrb[0].mxu0
    %1695 = vmatprep.mubr.f32.mxu0 0.0
    %1696 = vmatmul.mubr.f32.gmra.mrb[0].mxu0 %v634
    %v1697 = vpop.f32.mrb[0].mxu0
    %v1698 = vadd.f32 %v291, %v1697
    %v1699 = vpop.f32.mrb[0].mxu0
    %1700 = vmatprep.mubr.f32.mxu0 0.0
    %1701 = vmatmul.mubr.f32.gmra.mrb[0].mxu0 %v637
    %v1702 = vpop.f32.mrb[0].mxu0
    %v1703 = vadd.f32 %v291, %v1702
    %v1704 = vpop.f32.mrb[0].mxu0
    %1705 = vmatprep.mubr.f32.mxu0 0.0
    %1706 = vmatmul.mubr.f32.gmra.mrb[0].mxu0 %v640
    %v1707 = vpop.f32.mrb[0].mxu0
    %v1708 = vadd.f32 %v291, %v1707
    %v1709 = vpop.f32.mrb[0].mxu0
    %1710 = vmatprep.mubr.f32.mxu0 0.0
    %1711 = vmatmul.mubr.f32.gmra.mrb[0].mxu0 %v643
    %v1712 = vpop.f32.mrb[0].mxu0
    %v1713 = vadd.f32 %v291, %v1712
    %v1714 = vpop.f32.mrb[0].mxu0
    %1715 = vmatprep.mubr.f32.mxu0 0.0
    %1716 = vmatmul.mubr.f32.gmra.mrb[0].mxu0 %v646
    %v1717 = vpop.f32.mrb[0].mxu0
    %v1718 = vadd.f32 %v291, %v1717
    %v1719 = vpop.f32.mrb[0].mxu0
    %1720 = vmatprep.mubr.f32.mxu0 0.0
    %1721 = vmatmul.mubr.f32.gmra.mrb[0].mxu0 %v649
    %v1722 = vpop.f32.mrb[0].mxu0
    %v1723 = vadd.f32 %v291, %v1722
    %v1724 = vpop.f32.mrb[0].mxu0
    %1725 = vmatprep.mubr.f32.mxu0 0.0
    %1726 = vmatmul.mubr.f32.gmra.mrb[0].mxu0 %v652
    %v1727 = vpop.f32.mrb[0].mxu0
    %v1728 = vadd.f32 %v291, %v1727
    %v1729 = vpop.f32.mrb[0].mxu0
    %1730 = vmatprep.mubr.f32.mxu0 0.0
    %1731 = vmatmul.mubr.f32.gmra.mrb[0].mxu0 %v655
    %v1732 = vpop.f32.mrb[0].mxu0
    %v1733 = vadd.f32 %v291, %v1732
    %v1734 = vpop.f32.mrb[0].mxu0
    %1735 = vmatprep.mubr.f32.mxu0 0.0
    %1736 = vmatmul.mubr.f32.gmra.mrb[0].mxu0 %v658
    %v1737 = vpop.f32.mrb[0].mxu0
    %v1738 = vadd.f32 %v291, %v1737
    %v1739 = vpop.f32.mrb[0].mxu0
    %1740 = vmatprep.mubr.f32.mxu0 0.0
    %1741 = vmatmul.mubr.f32.gmra.mrb[0].mxu0 %v661
    %v1742 = vpop.f32.mrb[0].mxu0
    %v1743 = vadd.f32 %v291, %v1742
    %v1744 = vpop.f32.mrb[0].mxu0
    %1745 = vmatprep.mubr.f32.mxu0 0.0
    %1746 = vmatmul.mubr.f32.gmra.mrb[0].mxu0 %v664
    %v1747 = vpop.f32.mrb[0].mxu0
    %v1748 = vadd.f32 %v291, %v1747
    %v1749 = vpop.f32.mrb[0].mxu0
    %1750 = vmatprep.mubr.f32.mxu0 0.0
    %1751 = vmatmul.mubr.f32.gmra.mrb[0].mxu0 %v667
    %v1752 = vpop.f32.mrb[0].mxu0
    %v1753 = vadd.f32 %v291, %v1752
    %v1754 = vpop.f32.mrb[0].mxu0
    %1755 = vmatprep.mubr.f32.mxu0 0.0
    %1756 = vmatmul.mubr.f32.gmra.mrb[0].mxu0 %v670
    %v1757 = vpop.f32.mrb[0].mxu0
    %v1758 = vadd.f32 %v291, %v1757
    %v1759 = vpop.f32.mrb[0].mxu0
    %1760 = vmatprep.mubr.f32.mxu0 0.0
    %1761 = vmatmul.mubr.f32.gmra.mrb[0].mxu0 %v673
    %v1762 = vpop.f32.mrb[0].mxu0
    %v1763 = vadd.f32 %v291, %v1762
    %v1764 = vpop.f32.mrb[0].mxu0
    %1765 = vmatprep.mubr.f32.mxu0 0.0
    %1766 = vmatmul.mubr.f32.gmra.mrb[0].mxu0 %v676
    %v1767 = vpop.f32.mrb[0].mxu0
    %v1768 = vadd.f32 %v291, %v1767
    %v1769 = vpop.f32.mrb[0].mxu0
    %1770 = vmatprep.mubr.f32.mxu0 0.0
    %1771 = vmatmul.mubr.f32.gmra.mrb[0].mxu0 %v679
    %v1772 = vpop.f32.mrb[0].mxu0
    %v1773 = vadd.f32 %v291, %v1772
    %v1774 = vpop.f32.mrb[0].mxu0
    %1775 = vmatprep.mubr.f32.mxu0 0.0
    %1776 = vmatmul.mubr.f32.gmra.mrb[0].mxu0 %v682
    %v1777 = vpop.f32.mrb[0].mxu0
    %v1778 = vadd.f32 %v291, %v1777
    %v1779 = vpop.f32.mrb[0].mxu0
    %1780 = vmatprep.mubr.f32.mxu0 0.0
    %1781 = vmatmul.mubr.f32.gmra.mrb[0].mxu0 %v685
    %v1782 = vpop.f32.mrb[0].mxu0
    %v1783 = vadd.f32 %v291, %v1782
    %v1784 = vpop.f32.mrb[0].mxu0
    %1785 = vmatprep.mubr.f32.mxu0 0.0
    %1786 = vmatmul.mubr.f32.gmra.mrb[0].mxu0 %v688
    %v1787 = vpop.f32.mrb[0].mxu0
    %v1788 = vadd.f32 %v291, %v1787
    %v1789 = vpop.f32.mrb[0].mxu0
    %1790 = vmatprep.mubr.f32.mxu0 0.0
    %1791 = vmatmul.mubr.f32.gmra.mrb[0].mxu0 %v691
    %v1792 = vpop.f32.mrb[0].mxu0
    %v1793 = vadd.f32 %v291, %v1792
    %v1794 = vpop.f32.mrb[0].mxu0
    %1795 = vmatprep.mubr.f32.mxu0 0.0
    %1796 = vmatmul.mubr.f32.gmra.mrb[0].mxu0 %v694
    %v1797 = vpop.f32.mrb[0].mxu0
    %v1798 = vadd.f32 %v291, %v1797
    %v1799 = vpop.f32.mrb[0].mxu0
    %1800 = vmatprep.mubr.f32.mxu0 0.0
    %1801 = vmatmul.mubr.f32.gmra.mrb[0].mxu0 %v697
    %v1802 = vpop.f32.mrb[0].mxu0
    %v1803 = vadd.f32 %v291, %v1802
    %v1804 = vpop.f32.mrb[0].mxu0
    %1805 = vmatprep.mubr.f32.mxu0 0.0
    %1806 = vmatmul.mubr.f32.gmra.mrb[0].mxu0 %v700
    %v1807 = vpop.f32.mrb[0].mxu0
    %v1808 = vadd.f32 %v291, %v1807
    %v1809 = vpop.f32.mrb[0].mxu0
    %1810 = vmatprep.mubr.f32.mxu0 0.0
    %1811 = vmatmul.mubr.f32.gmra.mrb[0].mxu0 %v703
    %v1812 = vpop.f32.mrb[0].mxu0
    %v1813 = vadd.f32 %v291, %v1812
    %v1814 = vpop.f32.mrb[0].mxu0
    %1815 = vmatprep.mubr.f32.mxu0 0.0
    %1816 = vmatmul.mubr.f32.gmra.mrb[0].mxu0 %v706
    %v1817 = vpop.f32.mrb[0].mxu0
    %v1818 = vadd.f32 %v291, %v1817
    %v1819 = vpop.f32.mrb[0].mxu0
    %1820 = vmatprep.mubr.f32.mxu0 0.0
    %1821 = vmatmul.mubr.f32.gmra.mrb[0].mxu0 %v709
    %v1822 = vpop.f32.mrb[0].mxu0
    %v1823 = vadd.f32 %v291, %v1822
    %v1824 = vpop.f32.mrb[0].mxu0
    %1825 = vmatprep.mubr.f32.mxu0 0.0
    %1826 = vmatmul.mubr.f32.gmra.mrb[0].mxu0 %v712
    %v1827 = vpop.f32.mrb[0].mxu0
    %v1828 = vadd.f32 %v291, %v1827
    %v1829 = vpop.f32.mrb[0].mxu0
    %1830 = vmatprep.mubr.f32.mxu0 0.0
    %1831 = vmatmul.mubr.f32.gmra.mrb[0].mxu0 %v715
    %v1832 = vpop.f32.mrb[0].mxu0
    %v1833 = vadd.f32 %v291, %v1832
    %v1834 = vpop.f32.mrb[0].mxu0
    %1835 = vmatprep.mubr.f32.mxu0 0.0
    %1836 = vmatmul.mubr.f32.gmra.mrb[0].mxu0 %v718
    %v1837 = vpop.f32.mrb[0].mxu0
    %v1838 = vadd.f32 %v291, %v1837
    %v1839 = vpop.f32.mrb[0].mxu0
    %1840 = vmatprep.mubr.f32.mxu0 0.0
    %1841 = vmatmul.mubr.f32.gmra.mrb[0].mxu0 %v721
    %v1842 = vpop.f32.mrb[0].mxu0
    %v1843 = vadd.f32 %v291, %v1842
    %v1844 = vpop.f32.mrb[0].mxu0
    %1845 = vmatprep.mubr.f32.mxu0 0.0
    %1846 = vmatmul.mubr.f32.gmra.mrb[0].mxu0 %v724
    %v1847 = vpop.f32.mrb[0].mxu0
    %v1848 = vadd.f32 %v291, %v1847
    %v1849 = vpop.f32.mrb[0].mxu0
    %1850 = vmatprep.mubr.f32.mxu0 0.0
    %1851 = vmatmul.mubr.f32.gmra.mrb[0].mxu0 %v727
    %v1852 = vpop.f32.mrb[0].mxu0
    %v1853 = vadd.f32 %v291, %v1852
    %v1854 = vpop.f32.mrb[0].mxu0
    %1855 = vmatprep.mubr.f32.mxu0 0.0
    %1856 = vmatmul.mubr.f32.gmra.mrb[0].mxu0 %v730
    %v1857 = vpop.f32.mrb[0].mxu0
    %v1858 = vadd.f32 %v291, %v1857
    %v1859 = vpop.f32.mrb[0].mxu0
    %1860 = vmatprep.mubr.f32.mxu0 0.0
    %1861 = vmatmul.mubr.f32.gmra.mrb[0].mxu0 %v733
    %v1862 = vpop.f32.mrb[0].mxu0
    %v1863 = vadd.f32 %v291, %v1862
    %v1864 = vpop.f32.mrb[0].mxu0
    %1865 = vmatprep.mubr.f32.mxu0 0.0
    %1866 = vmatmul.mubr.f32.gmra.mrb[0].mxu0 %v736
    %v1867 = vpop.f32.mrb[0].mxu0
    %v1868 = vadd.f32 %v291, %v1867
    %v1869 = vpop.f32.mrb[0].mxu0
    %1870 = vmatprep.mubr.f32.mxu0 0.0
    %1871 = vmatmul.mubr.f32.gmra.mrb[0].mxu0 %v739
    %v1872 = vpop.f32.mrb[0].mxu0
    %v1873 = vadd.f32 %v291, %v1872
    %v1874 = vpop.f32.mrb[0].mxu0
    %1875 = vmatprep.mubr.f32.mxu0 0.0
    %1876 = vmatmul.mubr.f32.gmra.mrb[0].mxu0 %v742
    %v1877 = vpop.f32.mrb[0].mxu0
    %v1878 = vadd.f32 %v291, %v1877
    %v1879 = vpop.f32.mrb[0].mxu0
    %1880 = vmatprep.mubr.f32.mxu0 0.0
    %1881 = vmatmul.mubr.f32.gmra.mrb[0].mxu0 %v745
    %v1882 = vpop.f32.mrb[0].mxu0
    %v1883 = vadd.f32 %v291, %v1882
    %v1884 = vpop.f32.mrb[0].mxu0
    %1885 = vmatprep.mubr.f32.mxu0 0.0
    %1886 = vmatmul.mubr.f32.gmra.mrb[0].mxu0 %v748
    %v1887 = vpop.f32.mrb[0].mxu0
    %v1888 = vadd.f32 %v291, %v1887
    %v1889 = vpop.f32.mrb[0].mxu0
    %1890 = vmatprep.mubr.f32.mxu0 0.0
    %1891 = vmatmul.mubr.f32.gmra.mrb[0].mxu0 %v751
    %v1892 = vpop.f32.mrb[0].mxu0
    %v1893 = vadd.f32 %v291, %v1892
    %v1894 = vpop.f32.mrb[0].mxu0
    %1895 = vmatprep.mubr.f32.mxu0 0.0
    %1896 = vmatmul.mubr.f32.gmra.mrb[0].mxu0 %v754
    %v1897 = vpop.f32.mrb[0].mxu0
    %v1898 = vadd.f32 %v291, %v1897
    %v1899 = vpop.f32.mrb[0].mxu0
    %1900 = vmatprep.mubr.f32.mxu0 0.0
    %1901 = vmatmul.mubr.f32.gmra.mrb[0].mxu0 %v757
    %v1902 = vpop.f32.mrb[0].mxu0
    %v1903 = vadd.f32 %v291, %v1902
    %v1904 = vpop.f32.mrb[0].mxu0
    %1905 = vmatprep.mubr.f32.mxu0 0.0
    %1906 = vmatmul.mubr.f32.gmra.mrb[0].mxu0 %v760
    %v1907 = vpop.f32.mrb[0].mxu0
    %v1908 = vadd.f32 %v291, %v1907
    %v1909 = vpop.f32.mrb[0].mxu0
    %1910 = vmatprep.mubr.f32.mxu0 0.0
    %1911 = vmatmul.mubr.f32.gmra.mrb[0].mxu0 %v763
    %v1912 = vpop.f32.mrb[0].mxu0
    %v1913 = vadd.f32 %v291, %v1912
    %v1914 = vpop.f32.mrb[0].mxu0
    %1915 = vmatprep.mubr.f32.mxu0 0.0
    %1916 = vmatmul.mubr.f32.gmra.mrb[0].mxu0 %v766
    %v1917 = vpop.f32.mrb[0].mxu0
    %v1918 = vadd.f32 %v291, %v1917
    %v1919 = vpop.f32.mrb[0].mxu0
    %1920 = vmatprep.mubr.f32.mxu0 0.0
    %1921 = vmatmul.mubr.f32.gmra.mrb[0].mxu0 %v769
    %v1922 = vpop.f32.mrb[0].mxu0
    %v1923 = vadd.f32 %v291, %v1922
    %v1924 = vpop.f32.mrb[0].mxu0
    %1925 = vmatprep.mubr.f32.mxu0 0.0
    %1926 = vmatmul.mubr.f32.gmra.mrb[0].mxu0 %v772
    %v1927 = vpop.f32.mrb[0].mxu0
    %v1928 = vadd.f32 %v291, %v1927
    %v1929 = vpop.f32.mrb[0].mxu0
    %1930 = vmatprep.mubr.f32.mxu0 0.0
    %1931 = vmatmul.mubr.f32.gmra.mrb[0].mxu0 %v775
    %v1932 = vpop.f32.mrb[0].mxu0
    %v1933 = vadd.f32 %v291, %v1932
    %v1934 = vpop.f32.mrb[0].mxu0
    %1935 = vmatprep.mubr.f32.mxu0 0.0
    %1936 = vmatmul.mubr.f32.gmra.mrb[0].mxu0 %v778
    %v1937 = vpop.f32.mrb[0].mxu0
    %v1938 = vadd.f32 %v291, %v1937
    %v1939 = vpop.f32.mrb[0].mxu0
    %1940 = vmatprep.mubr.f32.mxu0 0.0
    %1941 = vmatmul.mubr.f32.gmra.mrb[0].mxu0 %v781
    %v1942 = vpop.f32.mrb[0].mxu0
    %v1943 = vadd.f32 %v291, %v1942
    %v1944 = vpop.f32.mrb[0].mxu0
    %1945 = vmatprep.mubr.f32.mxu0 0.0
    %1946 = vmatmul.mubr.f32.gmra.mrb[0].mxu0 %v784
    %v1947 = vpop.f32.mrb[0].mxu0
    %v1948 = vadd.f32 %v291, %v1947
    %v1949 = vpop.f32.mrb[0].mxu0
    %1950 = vmatprep.mubr.f32.mxu0 0.0
    %1951 = vmatmul.mubr.f32.gmra.mrb[0].mxu0 %v787
    %v1952 = vpop.f32.mrb[0].mxu0
    %v1953 = vadd.f32 %v291, %v1952
    %v1954 = vpop.f32.mrb[0].mxu0
    %1955 = vmatprep.mubr.f32.mxu0 0.0
    %1956 = vmatmul.mubr.f32.gmra.mrb[0].mxu0 %v790
    %v1957 = vpop.f32.mrb[0].mxu0
    %v1958 = vadd.f32 %v291, %v1957
    %v1959 = vpop.f32.mrb[0].mxu0
    %1960 = vmatprep.mubr.f32.mxu0 0.0
    %1961 = vmatmul.mubr.f32.gmra.mrb[0].mxu0 %v793
    %v1962 = vpop.f32.mrb[0].mxu0
    %v1963 = vadd.f32 %v291, %v1962
    %v1964 = vpop.f32.mrb[0].mxu0
    %1965 = vmatprep.mubr.f32.mxu0 0.0
    %1966 = vmatmul.mubr.f32.gmra.mrb[0].mxu0 %v796
    %v1967 = vpop.f32.mrb[0].mxu0
    %v1968 = vadd.f32 %v291, %v1967
    %v1969 = vpop.f32.mrb[0].mxu0
    %1970 = vmatprep.mubr.f32.mxu0 0.0
    %1971 = vmatmul.mubr.f32.gmra.mrb[0].mxu0 %v799
    %v1972 = vpop.f32.mrb[0].mxu0
    %v1973 = vadd.f32 %v291, %v1972
    %v1974 = vpop.f32.mrb[0].mxu0
    %1975 = vmatprep.mubr.f32.mxu0 0.0
    %1976 = vmatmul.mubr.f32.gmra.mrb[0].mxu0 %v802
    %v1977 = vpop.f32.mrb[0].mxu0
    %v1978 = vadd.f32 %v291, %v1977
    %v1979 = vpop.f32.mrb[0].mxu0
    %1980 = vmatprep.mubr.f32.mxu0 0.0
    %1981 = vmatmul.mubr.f32.gmra.mrb[0].mxu0 %v805
    %v1982 = vpop.f32.mrb[0].mxu0
    %v1983 = vadd.f32 %v291, %v1982
    %v1984 = vpop.f32.mrb[0].mxu0
    %1985 = vmatprep.mubr.f32.mxu0 0.0
    %1986 = vmatmul.mubr.f32.gmra.mrb[0].mxu0 %v808
    %v1987 = vpop.f32.mrb[0].mxu0
    %v1988 = vadd.f32 %v291, %v1987
    %v1989 = vpop.f32.mrb[0].mxu0
    %1990 = vmatprep.mubr.f32.mxu0 0.0
    %1991 = vmatmul.mubr.f32.gmra.mrb[0].mxu0 %v811
    %v1992 = vpop.f32.mrb[0].mxu0
    %v1993 = vadd.f32 %v291, %v1992
    %v1994 = vpop.f32.mrb[0].mxu0
    %1995 = vmatprep.mubr.f32.mxu0 0.0
    %1996 = vmatmul.mubr.f32.gmra.mrb[0].mxu0 %v814
    %v1997 = vpop.f32.mrb[0].mxu0
    %v1998 = vadd.f32 %v291, %v1997
    %v1999 = vpop.f32.mrb[0].mxu0
    %2000 = vmatprep.mubr.f32.mxu0 0.0
    %2001 = vmatmul.mubr.f32.gmra.mrb[0].mxu0 %v817
    %v2002 = vpop.f32.mrb[0].mxu0
    %v2003 = vadd.f32 %v291, %v2002
    %v2004 = vpop.f32.mrb[0].mxu0
    %2005 = vmatprep.mubr.f32.mxu0 0.0
    %2006 = vmatmul.mubr.f32.gmra.mrb[0].mxu0 %v820
    %v2007 = vpop.f32.mrb[0].mxu0
    %v2008 = vadd.f32 %v291, %v2007
    %v2009 = vpop.f32.mrb[0].mxu0
    %2010 = vmatprep.mubr.f32.mxu0 0.0
    %2011 = vmatmul.mubr.f32.gmra.mrb[0].mxu0 %v823
    %v2012 = vpop.f32.mrb[0].mxu0
    %v2013 = vadd.f32 %v291, %v2012
    %v2014 = vpop.f32.mrb[0].mxu0
    %2015 = vmatprep.mubr.f32.mxu0 0.0
    %2016 = vmatmul.mubr.f32.gmra.mrb[0].mxu0 %v826
    %v2017 = vpop.f32.mrb[0].mxu0
    %v2018 = vadd.f32 %v291, %v2017
    %v2019 = vpop.f32.mrb[0].mxu0
    %2020 = vmatprep.mubr.f32.mxu0 0.0
    %2021 = vmatmul.mubr.f32.gmra.mrb[0].mxu0 %v829
    %v2022 = vpop.f32.mrb[0].mxu0
    %v2023 = vadd.f32 %v291, %v2022
    %v2024 = vpop.f32.mrb[0].mxu0
    %2025 = vmatprep.mubr.f32.mxu0 0.0
    %2026 = vmatmul.mubr.f32.gmra.mrb[0].mxu0 %v832
    %v2027 = vpop.f32.mrb[0].mxu0
    %v2028 = vadd.f32 %v291, %v2027
    %v2029 = vpop.f32.mrb[0].mxu0
    %2030 = vmatprep.mubr.f32.mxu0 0.0
    %2031 = vmatmul.mubr.f32.gmra.mrb[0].mxu0 %v835
    %v2032 = vpop.f32.mrb[0].mxu0
    %v2033 = vadd.f32 %v291, %v2032
    %v2034 = vpop.f32.mrb[0].mxu0
    %2035 = vmatprep.mubr.f32.mxu0 0.0
    %2036 = vmatmul.mubr.f32.gmra.mrb[0].mxu0 %v838
    %v2037 = vpop.f32.mrb[0].mxu0
    %v2038 = vadd.f32 %v291, %v2037
    %v2039 = vpop.f32.mrb[0].mxu0
    %2040 = vmatprep.mubr.f32.mxu0 0.0
    %2041 = vmatmul.mubr.f32.gmra.mrb[0].mxu0 %v841
    %v2042 = vpop.f32.mrb[0].mxu0
    %v2043 = vadd.f32 %v291, %v2042
    %v2044 = vpop.f32.mrb[0].mxu0
    %2045 = vmatprep.mubr.f32.mxu0 0.0
    %2046 = vmatmul.mubr.f32.gmra.mrb[0].mxu0 %v844
    %v2047 = vpop.f32.mrb[0].mxu0
    %v2048 = vadd.f32 %v291, %v2047
    %v2049 = vpop.f32.mrb[0].mxu0
    %2050 = vmatprep.mubr.f32.mxu0 0.0
    %2051 = vmatmul.mubr.f32.gmra.mrb[0].mxu0 %v847
    %v2052 = vpop.f32.mrb[0].mxu0
    %v2053 = vadd.f32 %v291, %v2052
    %v2054 = vpop.f32.mrb[0].mxu0
    %2055 = vmatprep.mubr.f32.mxu0 0.0
    %2056 = vmatmul.mubr.f32.gmra.mrb[0].mxu0 %v850
    %v2057 = vpop.f32.mrb[0].mxu0
    %v2058 = vadd.f32 %v291, %v2057
    %v2059 = vpop.f32.mrb[0].mxu0
    %2060 = vmatprep.mubr.f32.mxu0 0.0
    %2061 = vmatmul.mubr.f32.gmra.mrb[0].mxu0 %v853
    %v2062 = vpop.f32.mrb[0].mxu0
    %v2063 = vadd.f32 %v291, %v2062
    %v2064 = vpop.f32.mrb[0].mxu0
    %2065 = vmatprep.mubr.f32.mxu0 0.0
    %2066 = vmatmul.mubr.f32.gmra.mrb[0].mxu0 %v856
    %v2067 = vpop.f32.mrb[0].mxu0
    %v2068 = vadd.f32 %v291, %v2067
    %v2069 = vpop.f32.mrb[0].mxu0
    %2070 = vmatprep.mubr.f32.mxu0 0.0
    %2071 = vmatmul.mubr.f32.gmra.mrb[0].mxu0 %v859
    %v2072 = vpop.f32.mrb[0].mxu0
    %v2073 = vadd.f32 %v291, %v2072
    %v2074 = vpop.f32.mrb[0].mxu0
    %2075 = vmatprep.mubr.f32.mxu0 0.0
    %2076 = vmatmul.mubr.f32.gmra.mrb[0].mxu0 %v862
    %v2077 = vpop.f32.mrb[0].mxu0
    %v2078 = vadd.f32 %v291, %v2077
    %v2079 = vpop.f32.mrb[0].mxu0
    %2080 = vmatprep.mubr.f32.mxu0 0.0
    %2081 = vmatmul.mubr.f32.gmra.mrb[0].mxu0 %v865
    %v2082 = vpop.f32.mrb[0].mxu0
    %v2083 = vadd.f32 %v291, %v2082
    %v2084 = vpop.f32.mrb[0].mxu0
    %2085 = vmatprep.mubr.f32.mxu0 0.0
    %2086 = vmatmul.mubr.f32.gmra.mrb[0].mxu0 %v868
    %v2087 = vpop.f32.mrb[0].mxu0
    %v2088 = vadd.f32 %v291, %v2087
    %v2089 = vpop.f32.mrb[0].mxu0
    %2090 = vmatprep.mubr.f32.mxu0 0.0
    %2091 = vmatmul.mubr.f32.gmra.mrb[0].mxu0 %v871
    %v2092 = vpop.f32.mrb[0].mxu0
    %v2093 = vadd.f32 %v291, %v2092
    %v2094 = vpop.f32.mrb[0].mxu0
    %2095 = vmatprep.mubr.f32.mxu0 0.0
    %2096 = vmatmul.mubr.f32.gmra.mrb[0].mxu0 %v874
    %v2097 = vpop.f32.mrb[0].mxu0
    %v2098 = vadd.f32 %v291, %v2097
    %v2099 = vpop.f32.mrb[0].mxu0
    %2100 = vmatprep.mubr.f32.mxu0 0.0
    %2101 = vmatmul.mubr.f32.gmra.mrb[0].mxu0 %v877
    %v2102 = vpop.f32.mrb[0].mxu0
    %v2103 = vadd.f32 %v291, %v2102
    %v2104 = vpop.f32.mrb[0].mxu0
    %2105 = vmatprep.mubr.f32.mxu0 0.0
    %2106 = vmatmul.mubr.f32.gmra.mrb[0].mxu0 %v880
    %v2107 = vpop.f32.mrb[0].mxu0
    %v2108 = vadd.f32 %v291, %v2107
    %v2109 = vpop.f32.mrb[0].mxu0
    %2110 = vmatprep.mubr.f32.mxu0 0.0
    %2111 = vmatmul.mubr.f32.gmra.mrb[0].mxu0 %v883
    %v2112 = vpop.f32.mrb[0].mxu0
    %v2113 = vadd.f32 %v291, %v2112
    %v2114 = vpop.f32.mrb[0].mxu0
    %2115 = vmatprep.mubr.f32.mxu0 0.0
    %2116 = vmatmul.mubr.f32.gmra.mrb[0].mxu0 %v886
    %v2117 = vpop.f32.mrb[0].mxu0
    %v2118 = vadd.f32 %v291, %v2117
    %v2119 = vpop.f32.mrb[0].mxu0
    %2120 = vmatprep.mubr.f32.mxu0 0.0
    %2121 = vmatmul.mubr.f32.gmra.mrb[0].mxu0 %v889
    %v2122 = vpop.f32.mrb[0].mxu0
    %v2123 = vadd.f32 %v291, %v2122
    %v2124 = vpop.f32.mrb[0].mxu0
    %2125 = vmatprep.mubr.f32.mxu0 0.0
    %2126 = vmatmul.mubr.f32.gmra.mrb[0].mxu0 %v892
    %v2127 = vpop.f32.mrb[0].mxu0
    %v2128 = vadd.f32 %v291, %v2127
    %v2129 = vpop.f32.mrb[0].mxu0
    %2130 = vmatprep.mubr.f32.mxu0 0.0
    %2131 = vmatmul.mubr.f32.gmra.mrb[0].mxu0 %v895
    %v2132 = vpop.f32.mrb[0].mxu0
    %v2133 = vadd.f32 %v291, %v2132
    %v2134 = vpop.f32.mrb[0].mxu0
    %2135 = vmatprep.mubr.f32.mxu0 0.0
    %2136 = vmatmul.mubr.f32.gmra.mrb[0].mxu0 %v898
    %v2137 = vpop.f32.mrb[0].mxu0
    %v2138 = vadd.f32 %v291, %v2137
    %v2139 = vpop.f32.mrb[0].mxu0
    %2140 = vmatprep.mubr.f32.mxu0 0.0
    %2141 = vmatmul.mubr.f32.gmra.mrb[0].mxu0 %v901
    %v2142 = vpop.f32.mrb[0].mxu0
    %v2143 = vadd.f32 %v291, %v2142
    %v2144 = vpop.f32.mrb[0].mxu0
    %2145 = vmatprep.mubr.f32.mxu0 0.0
    %2146 = vmatmul.mubr.f32.gmra.mrb[0].mxu0 %v904
    %v2147 = vpop.f32.mrb[0].mxu0
    %v2148 = vadd.f32 %v291, %v2147
    %v2149 = vpop.f32.mrb[0].mxu0
    %2150 = vmatprep.mubr.f32.mxu0 0.0
    %2151 = vmatmul.mubr.f32.gmra.mrb[0].mxu0 %v907
    %v2152 = vpop.f32.mrb[0].mxu0
    %v2153 = vadd.f32 %v291, %v2152
    %v2154 = vpop.f32.mrb[0].mxu0
    %2155 = vmatprep.mubr.f32.mxu0 0.0
    %2156 = vmatmul.mubr.f32.gmra.mrb[0].mxu0 %v910
    %v2157 = vpop.f32.mrb[0].mxu0
    %v2158 = vadd.f32 %v291, %v2157
    %v2159 = vpop.f32.mrb[0].mxu0
    %2160 = vmatprep.mubr.f32.mxu0 0.0
    %2161 = vmatmul.mubr.f32.gmra.mrb[0].mxu0 %v913
    %v2162 = vpop.f32.mrb[0].mxu0
    %v2163 = vadd.f32 %v291, %v2162
    %v2164 = vpop.f32.mrb[0].mxu0
    %2165 = vmatprep.mubr.f32.mxu0 0.0
    %2166 = vmatmul.mubr.f32.gmra.mrb[0].mxu0 %v916
    %v2167 = vpop.f32.mrb[0].mxu0
    %v2168 = vadd.f32 %v291, %v2167
    %v2169 = vpop.f32.mrb[0].mxu0
    %2170 = vmatprep.mubr.f32.mxu0 0.0
    %2171 = vmatmul.mubr.f32.gmra.mrb[0].mxu0 %v919
    %v2172 = vpop.f32.mrb[0].mxu0
    %v2173 = vadd.f32 %v291, %v2172
    %v2174 = vpop.f32.mrb[0].mxu0
    %2175 = vmatprep.mubr.f32.mxu0 0.0
    %2176 = vmatmul.mubr.f32.gmra.mrb[0].mxu0 %v922
    %v2177 = vpop.f32.mrb[0].mxu0
    %v2178 = vadd.f32 %v291, %v2177
    %v2179 = vpop.f32.mrb[0].mxu0
    %2180 = vmatprep.mubr.f32.mxu0 0.0
    %2181 = vmatmul.mubr.f32.gmra.mrb[0].mxu0 %v925
    %v2182 = vpop.f32.mrb[0].mxu0
    %v2183 = vadd.f32 %v291, %v2182
    %v2184 = vpop.f32.mrb[0].mxu0
    %2185 = vmatprep.mubr.f32.mxu0 0.0
    %2186 = vmatmul.mubr.f32.gmra.mrb[0].mxu0 %v928
    %v2187 = vpop.f32.mrb[0].mxu0
    %v2188 = vadd.f32 %v291, %v2187
    %v2189 = vpop.f32.mrb[0].mxu0
    %2190 = vmatprep.mubr.f32.mxu0 0.0
    %2191 = vmatmul.mubr.f32.gmra.mrb[0].mxu0 %v931
    %v2192 = vpop.f32.mrb[0].mxu0
    %v2193 = vadd.f32 %v291, %v2192
    %v2194 = vpop.f32.mrb[0].mxu0
    %2195 = vmatprep.mubr.f32.mxu0 0.0
    %2196 = vmatmul.mubr.f32.gmra.mrb[0].mxu0 %v934
    %v2197 = vpop.f32.mrb[0].mxu0
    %v2198 = vadd.f32 %v291, %v2197
    %v2199 = vpop.f32.mrb[0].mxu0
    %2200 = vmatprep.mubr.f32.mxu0 0.0
    %2201 = vmatmul.mubr.f32.gmra.mrb[0].mxu0 %v937
    %v2202 = vpop.f32.mrb[0].mxu0
    %v2203 = vadd.f32 %v291, %v2202
    %v2204 = vpop.f32.mrb[0].mxu0
    %2205 = vmatprep.mubr.f32.mxu0 0.0
    %2206 = vmatmul.mubr.f32.gmra.mrb[0].mxu0 %v940
    %v2207 = vpop.f32.mrb[0].mxu0
    %v2208 = vadd.f32 %v291, %v2207
    %v2209 = vpop.f32.mrb[0].mxu0
    %2210 = vmatprep.mubr.f32.mxu0 0.0
    %2211 = vmatmul.mubr.f32.gmra.mrb[0].mxu0 %v943
    %v2212 = vpop.f32.mrb[0].mxu0
    %v2213 = vadd.f32 %v291, %v2212
    %v2214 = vpop.f32.mrb[0].mxu0
    %2215 = vmatprep.mubr.f32.mxu0 0.0
    %2216 = vmatmul.mubr.f32.gmra.mrb[0].mxu0 %v946
    %v2217 = vpop.f32.mrb[0].mxu0
    %v2218 = vadd.f32 %v291, %v2217
    %v2219 = vpop.f32.mrb[0].mxu0
    %2220 = vmatprep.mubr.f32.mxu0 0.0
    %2221 = vmatmul.mubr.f32.gmra.mrb[0].mxu0 %v949
    %v2222 = vpop.f32.mrb[0].mxu0
    %v2223 = vadd.f32 %v291, %v2222
    %v2224 = vpop.f32.mrb[0].mxu0
    %2225 = vmatprep.mubr.f32.mxu0 0.0
    %2226 = vmatmul.mubr.f32.gmra.mrb[0].mxu0 %v952
    %v2227 = vpop.f32.mrb[0].mxu0
    %v2228 = vadd.f32 %v291, %v2227
    %v2229 = vpop.f32.mrb[0].mxu0
    %2230 = vmatprep.mubr.f32.mxu0 0.0
    %2231 = vmatmul.mubr.f32.gmra.mrb[0].mxu0 %v955
    %v2232 = vpop.f32.mrb[0].mxu0
    %v2233 = vadd.f32 %v291, %v2232
    %v2234 = vpop.f32.mrb[0].mxu0
    %2235 = vmatprep.mubr.f32.mxu0 0.0
    %2236 = vmatmul.mubr.f32.gmra.mrb[0].mxu0 %v958
    %v2237 = vpop.f32.mrb[0].mxu0
    %v2238 = vadd.f32 %v291, %v2237
    %v2239 = vpop.f32.mrb[0].mxu0
    %2240 = vmatprep.mubr.f32.mxu0 0.0
    %2241 = vmatmul.mubr.f32.gmra.mrb[0].mxu0 %v961
    %v2242 = vpop.f32.mrb[0].mxu0
    %v2243 = vadd.f32 %v291, %v2242
    %v2244 = vpop.f32.mrb[0].mxu0
    %2245 = vmatprep.mubr.f32.mxu0 0.0
    %2246 = vmatmul.mubr.f32.gmra.mrb[0].mxu0 %v964
    %v2247 = vpop.f32.mrb[0].mxu0
    %v2248 = vadd.f32 %v291, %v2247
    %v2249 = vpop.f32.mrb[0].mxu0
    %2250 = vmatprep.mubr.f32.mxu0 0.0
    %2251 = vmatmul.mubr.f32.gmra.mrb[0].mxu0 %v967
    %v2252 = vpop.f32.mrb[0].mxu0
    %v2253 = vadd.f32 %v291, %v2252
    %v2254 = vpop.f32.mrb[0].mxu0
    %2255 = vmatprep.mubr.f32.mxu0 0.0
    %2256 = vmatmul.mubr.f32.gmra.mrb[0].mxu0 %v970
    %v2257 = vpop.f32.mrb[0].mxu0
    %v2258 = vadd.f32 %v291, %v2257
    %v2259 = vpop.f32.mrb[0].mxu0
    %2260 = vmatprep.mubr.f32.mxu0 0.0
    %2261 = vmatmul.mubr.f32.gmra.mrb[0].mxu0 %v973
    %v2262 = vpop.f32.mrb[0].mxu0
    %v2263 = vadd.f32 %v291, %v2262
    %v2264 = vpop.f32.mrb[0].mxu0
    %2265 = vmatprep.mubr.f32.mxu0 0.0
    %2266 = vmatmul.mubr.f32.gmra.mrb[0].mxu0 %v976
    %v2267 = vpop.f32.mrb[0].mxu0
    %v2268 = vadd.f32 %v291, %v2267
    %v2269 = vpop.f32.mrb[0].mxu0
    %2270 = vmatprep.mubr.f32.mxu0 0.0
    %2271 = vmatmul.mubr.f32.gmra.mrb[0].mxu0 %v979
    %v2272 = vpop.f32.mrb[0].mxu0
    %v2273 = vadd.f32 %v291, %v2272
    %v2274 = vpop.f32.mrb[0].mxu0
    %2275 = vmatprep.mubr.f32.mxu0 0.0
    %2276 = vmatmul.mubr.f32.gmra.mrb[0].mxu0 %v982
    %v2277 = vpop.f32.mrb[0].mxu0
    %v2278 = vadd.f32 %v291, %v2277
    %v2279 = vpop.f32.mrb[0].mxu0
    %2280 = vmatprep.mubr.f32.mxu0 0.0
    %2281 = vmatmul.mubr.f32.gmra.mrb[0].mxu0 %v985
    %v2282 = vpop.f32.mrb[0].mxu0
    %v2283 = vadd.f32 %v291, %v2282
    %v2284 = vpop.f32.mrb[0].mxu0
    %2285 = vmatprep.mubr.f32.mxu0 0.0
    %2286 = vmatmul.mubr.f32.gmra.mrb[0].mxu0 %v988
    %v2287 = vpop.f32.mrb[0].mxu0
    %v2288 = vadd.f32 %v291, %v2287
    %v2289 = vpop.f32.mrb[0].mxu0
    %2290 = vmatprep.mubr.f32.mxu0 0.0
    %2291 = vmatmul.mubr.f32.gmra.mrb[0].mxu0 %v991
    %v2292 = vpop.f32.mrb[0].mxu0
    %v2293 = vadd.f32 %v291, %v2292
    %v2294 = vpop.f32.mrb[0].mxu0
    %2295 = vmatprep.mubr.f32.mxu0 0.0
    %2296 = vmatmul.mubr.f32.gmra.mrb[0].mxu0 %v994
    %v2297 = vpop.f32.mrb[0].mxu0
    %v2298 = vadd.f32 %v291, %v2297
    %v2299 = vpop.f32.mrb[0].mxu0
    %2300 = vmatprep.mubr.f32.mxu0 0.0
    %2301 = vmatmul.mubr.f32.gmra.mrb[0].mxu0 %v997
    %v2302 = vpop.f32.mrb[0].mxu0
    %v2303 = vadd.f32 %v291, %v2302
    %v2304 = vpop.f32.mrb[0].mxu0
    %2305 = vmatprep.mubr.f32.mxu0 0.0
    %2306 = vmatmul.mubr.f32.gmra.mrb[0].mxu0 %v1000
    %v2307 = vpop.f32.mrb[0].mxu0
    %v2308 = vadd.f32 %v291, %v2307
    %v2309 = vpop.f32.mrb[0].mxu0
    %2310 = vmatprep.mubr.f32.mxu0 0.0
    %2311 = vmatmul.mubr.f32.gmra.mrb[0].mxu0 %v1003
    %v2312 = vpop.f32.mrb[0].mxu0
    %v2313 = vadd.f32 %v291, %v2312
    %v2314 = vpop.f32.mrb[0].mxu0
    %2315 = vmatprep.mubr.f32.mxu0 0.0
    %2316 = vmatmul.mubr.f32.gmra.mrb[0].mxu0 %v1006
    %v2317 = vpop.f32.mrb[0].mxu0
    %v2318 = vadd.f32 %v291, %v2317
    %v2319 = vpop.f32.mrb[0].mxu0
    %2320 = vmatprep.mubr.f32.mxu0 0.0
    %2321 = vmatmul.mubr.f32.gmra.mrb[0].mxu0 %v1009
    %v2322 = vpop.f32.mrb[0].mxu0
    %v2323 = vadd.f32 %v291, %v2322
    %v2324 = vpop.f32.mrb[0].mxu0
    %2325 = vmatprep.mubr.f32.mxu0 0.0
    %2326 = vmatmul.mubr.f32.gmra.mrb[0].mxu0 %v1012
    %v2327 = vpop.f32.mrb[0].mxu0
    %v2328 = vadd.f32 %v291, %v2327
    %v2329 = vpop.f32.mrb[0].mxu0
    %2330 = vmatprep.mubr.f32.mxu0 0.0
    %2331 = vmatmul.mubr.f32.gmra.mrb[0].mxu0 %v1015
    %v2332 = vpop.f32.mrb[0].mxu0
    %v2333 = vadd.f32 %v291, %v2332
    %v2334 = vpop.f32.mrb[0].mxu0
    %2335 = vmatprep.mubr.f32.mxu0 0.0
    %2336 = vmatmul.mubr.f32.gmra.mrb[0].mxu0 %v1018
    %v2337 = vpop.f32.mrb[0].mxu0
    %v2338 = vadd.f32 %v291, %v2337
    %v2339 = vpop.f32.mrb[0].mxu0
    %2340 = vmatprep.mubr.f32.mxu0 0.0
    %2341 = vmatmul.mubr.f32.gmra.mrb[0].mxu0 %v1021
    %v2342 = vpop.f32.mrb[0].mxu0
    %v2343 = vadd.f32 %v291, %v2342
    %v2344 = vpop.f32.mrb[0].mxu0
    %2345 = vmatprep.mubr.f32.mxu0 0.0
    %2346 = vmatmul.mubr.f32.gmra.mrb[0].mxu0 %v1024
    %v2347 = vpop.f32.mrb[0].mxu0
    %v2348 = vadd.f32 %v291, %v2347
    %v2349 = vpop.f32.mrb[0].mxu0
    %2350 = vmatprep.mubr.f32.mxu0 0.0
    %2351 = vmatmul.mubr.f32.gmra.mrb[0].mxu0 %v1027
    %v2352 = vpop.f32.mrb[0].mxu0
    %v2353 = vadd.f32 %v291, %v2352
    %v2354 = vpop.f32.mrb[0].mxu0
    %2355 = vmatprep.mubr.f32.mxu0 0.0
    %2356 = vmatmul.mubr.f32.gmra.mrb[0].mxu0 %v1030
    %v2357 = vpop.f32.mrb[0].mxu0
    %v2358 = vadd.f32 %v291, %v2357
    %v2359 = vpop.f32.mrb[0].mxu0
    %2360 = vmatprep.mubr.f32.mxu0 0.0
    %2361 = vmatmul.mubr.f32.gmra.mrb[0].mxu0 %v1033
    %v2362 = vpop.f32.mrb[0].mxu0
    %v2363 = vadd.f32 %v291, %v2362
    %v2364 = vpop.f32.mrb[0].mxu0
    %2365 = vmatprep.mubr.f32.mxu0 0.0
    %2366 = vmatmul.mubr.f32.gmra.mrb[0].mxu0 %v1036
    %v2367 = vpop.f32.mrb[0].mxu0
    %v2368 = vadd.f32 %v291, %v2367
    %v2369 = vpop.f32.mrb[0].mxu0
    %2370 = vmatprep.mubr.f32.mxu0 0.0
    %2371 = vmatmul.mubr.f32.gmra.mrb[0].mxu0 %v1039
    %v2372 = vpop.f32.mrb[0].mxu0
    %v2373 = vadd.f32 %v291, %v2372
    %v2374 = vpop.f32.mrb[0].mxu0
    %2375 = vmatprep.mubr.f32.mxu0 0.0
    %2376 = vmatmul.mubr.f32.gmra.mrb[0].mxu0 %v1042
    %v2377 = vpop.f32.mrb[0].mxu0
    %v2378 = vadd.f32 %v291, %v2377
    %v2379 = vpop.f32.mrb[0].mxu0
    %2380 = vmatprep.mubr.f32.mxu0 0.0
    %2381 = vmatmul.mubr.f32.gmra.mrb[0].mxu0 %v1045
    %v2382 = vpop.f32.mrb[0].mxu0
    %v2383 = vadd.f32 %v291, %v2382
    %v2384 = vpop.f32.mrb[0].mxu0
    %2385 = vmatprep.mubr.f32.mxu0 0.0
    %2386 = vmatmul.mubr.f32.gmra.mrb[0].mxu0 %v1048
    %v2387 = vpop.f32.mrb[0].mxu0
    %v2388 = vadd.f32 %v291, %v2387
    %v2389 = vpop.f32.mrb[0].mxu0
    %2390 = vmatprep.mubr.f32.mxu0 0.0
    %2391 = vmatmul.mubr.f32.gmra.mrb[0].mxu0 %v1051
    %v2392 = vpop.f32.mrb[0].mxu0
    %v2393 = vadd.f32 %v291, %v2392
    %v2394 = vpop.f32.mrb[0].mxu0
    %2395 = vmatprep.mubr.f32.mxu0 0.0
    %2396 = vmatmul.mubr.f32.gmra.mrb[0].mxu0 %v1054
    %v2397 = vpop.f32.mrb[0].mxu0
    %v2398 = vadd.f32 %v291, %v2397
    %v2399 = vpop.f32.mrb[0].mxu0
    %2400 = vmatprep.mubr.f32.mxu0 0.0
    %2401 = vmatmul.mubr.f32.gmra.mrb[0].mxu0 %v1057
    %v2402 = vpop.f32.mrb[0].mxu0
    %v2403 = vadd.f32 %v291, %v2402
    %v2404 = vpop.f32.mrb[0].mxu0
    %2405 = vmatprep.mubr.f32.mxu0 0.0
    %2406 = vmatmul.mubr.f32.gmra.mrb[0].mxu0 %v1060
    %v2407 = vpop.f32.mrb[0].mxu0
    %v2408 = vadd.f32 %v291, %v2407
    %v2409 = vpop.f32.mrb[0].mxu0
    %2410 = vdwg.mxu0
    %v2411 = vmax.f32 %v1133, 0.0
    %v2412 = vmax.f32 %v1138, 0.0
    %v2413 = vmax.f32 %v1143, 0.0
    %v2414 = vmax.f32 %v1148, 0.0
    %v2415 = vmax.f32 %v1153, 0.0
    %v2416 = vmax.f32 %v1158, 0.0
    %v2417 = vmax.f32 %v1163, 0.0
    %v2418 = vmax.f32 %v1168, 0.0
    %v2419 = vmax.f32 %v1173, 0.0
    %v2420 = vmax.f32 %v1178, 0.0
    %v2421 = vmax.f32 %v1183, 0.0
    %v2422 = vmax.f32 %v1188, 0.0
    %v2423 = vmax.f32 %v1193, 0.0
    %v2424 = vmax.f32 %v1198, 0.0
    %v2425 = vmax.f32 %v1203, 0.0
    %v2426 = vmax.f32 %v1208, 0.0
    %v2427 = vmax.f32 %v1213, 0.0
    %v2428 = vmax.f32 %v1218, 0.0
    %v2429 = vmax.f32 %v1223, 0.0
    %v2430 = vmax.f32 %v1228, 0.0
    %v2431 = vmax.f32 %v1233, 0.0
    %v2432 = vmax.f32 %v1238, 0.0
    %v2433 = vmax.f32 %v1243, 0.0
    %v2434 = vmax.f32 %v1248, 0.0
    %v2435 = vmax.f32 %v1253, 0.0
    %v2436 = vmax.f32 %v1258, 0.0
    %v2437 = vmax.f32 %v1263, 0.0
    %v2438 = vmax.f32 %v1268, 0.0
    %v2439 = vmax.f32 %v1273, 0.0
    %v2440 = vmax.f32 %v1278, 0.0
    %v2441 = vmax.f32 %v1283, 0.0
    %v2442 = vmax.f32 %v1288, 0.0
    %v2443 = vmax.f32 %v1293, 0.0
    %v2444 = vmax.f32 %v1298, 0.0
    %v2445 = vmax.f32 %v1303, 0.0
    %v2446 = vmax.f32 %v1308, 0.0
    %v2447 = vmax.f32 %v1313, 0.0
    %v2448 = vmax.f32 %v1318, 0.0
    %v2449 = vmax.f32 %v1323, 0.0
    %v2450 = vmax.f32 %v1328, 0.0
    %v2451 = vmax.f32 %v1333, 0.0
    %v2452 = vmax.f32 %v1338, 0.0
    %v2453 = vmax.f32 %v1343, 0.0
    %v2454 = vmax.f32 %v1348, 0.0
    %v2455 = vmax.f32 %v1353, 0.0
    %v2456 = vmax.f32 %v1358, 0.0
    %v2457 = vmax.f32 %v1363, 0.0
    %v2458 = vmax.f32 %v1368, 0.0
    %v2459 = vmax.f32 %v1373, 0.0
    %v2460 = vmax.f32 %v1378, 0.0
    %v2461 = vmax.f32 %v1383, 0.0
    %v2462 = vmax.f32 %v1388, 0.0
    %v2463 = vmax.f32 %v1393, 0.0
    %v2464 = vmax.f32 %v1398, 0.0
    %v2465 = vmax.f32 %v1403, 0.0
    %v2466 = vmax.f32 %v1408, 0.0
    %v2467 = vmax.f32 %v1413, 0.0
    %v2468 = vmax.f32 %v1418, 0.0
    %v2469 = vmax.f32 %v1423, 0.0
    %v2470 = vmax.f32 %v1428, 0.0
    %v2471 = vmax.f32 %v1433, 0.0
    %v2472 = vmax.f32 %v1438, 0.0
    %v2473 = vmax.f32 %v1443, 0.0
    %v2474 = vmax.f32 %v1448, 0.0
    %v2475 = vmax.f32 %v1453, 0.0
    %v2476 = vmax.f32 %v1458, 0.0
    %v2477 = vmax.f32 %v1463, 0.0
    %v2478 = vmax.f32 %v1468, 0.0
    %v2479 = vmax.f32 %v1473, 0.0
    %v2480 = vmax.f32 %v1478, 0.0
    %v2481 = vmax.f32 %v1483, 0.0
    %v2482 = vmax.f32 %v1488, 0.0
    %v2483 = vmax.f32 %v1493, 0.0
    %v2484 = vmax.f32 %v1498, 0.0
    %v2485 = vmax.f32 %v1503, 0.0
    %v2486 = vmax.f32 %v1508, 0.0
    %v2487 = vmax.f32 %v1513, 0.0
    %v2488 = vmax.f32 %v1518, 0.0
    %v2489 = vmax.f32 %v1523, 0.0
    %v2490 = vmax.f32 %v1528, 0.0
    %v2491 = vmax.f32 %v1533, 0.0
    %v2492 = vmax.f32 %v1538, 0.0
    %v2493 = vmax.f32 %v1543, 0.0
    %v2494 = vmax.f32 %v1548, 0.0
    %v2495 = vmax.f32 %v1553, 0.0
    %v2496 = vmax.f32 %v1558, 0.0
    %v2497 = vmax.f32 %v1563, 0.0
    %v2498 = vmax.f32 %v1568, 0.0
    %v2499 = vmax.f32 %v1573, 0.0
    %v2500 = vmax.f32 %v1578, 0.0
    %v2501 = vmax.f32 %v1583, 0.0
    %v2502 = vmax.f32 %v1588, 0.0
    %v2503 = vmax.f32 %v1593, 0.0
    %v2504 = vmax.f32 %v1598, 0.0
    %v2505 = vmax.f32 %v1603, 0.0
    %v2506 = vmax.f32 %v1608, 0.0
    %v2507 = vmax.f32 %v1613, 0.0
    %v2508 = vmax.f32 %v1618, 0.0
    %v2509 = vmax.f32 %v1623, 0.0
    %v2510 = vmax.f32 %v1628, 0.0
    %v2511 = vmax.f32 %v1633, 0.0
    %v2512 = vmax.f32 %v1638, 0.0
    %v2513 = vmax.f32 %v1643, 0.0
    %v2514 = vmax.f32 %v1648, 0.0
    %v2515 = vmax.f32 %v1653, 0.0
    %v2516 = vmax.f32 %v1658, 0.0
    %v2517 = vmax.f32 %v1663, 0.0
    %v2518 = vmax.f32 %v1668, 0.0
    %v2519 = vmax.f32 %v1673, 0.0
    %v2520 = vmax.f32 %v1678, 0.0
    %v2521 = vmax.f32 %v1683, 0.0
    %v2522 = vmax.f32 %v1688, 0.0
    %v2523 = vmax.f32 %v1693, 0.0
    %v2524 = vmax.f32 %v1698, 0.0
    %v2525 = vmax.f32 %v1703, 0.0
    %v2526 = vmax.f32 %v1708, 0.0
    %v2527 = vmax.f32 %v1713, 0.0
    %v2528 = vmax.f32 %v1718, 0.0
    %v2529 = vmax.f32 %v1723, 0.0
    %v2530 = vmax.f32 %v1728, 0.0
    %v2531 = vmax.f32 %v1733, 0.0
    %v2532 = vmax.f32 %v1738, 0.0
    %v2533 = vmax.f32 %v1743, 0.0
    %v2534 = vmax.f32 %v1748, 0.0
    %v2535 = vmax.f32 %v1753, 0.0
    %v2536 = vmax.f32 %v1758, 0.0
    %v2537 = vmax.f32 %v1763, 0.0
    %v2538 = vmax.f32 %v1768, 0.0
    %v2539 = vmax.f32 %v1773, 0.0
    %v2540 = vmax.f32 %v1778, 0.0
    %v2541 = vmax.f32 %v1783, 0.0
    %v2542 = vmax.f32 %v1788, 0.0
    %v2543 = vmax.f32 %v1793, 0.0
    %v2544 = vmax.f32 %v1798, 0.0
    %v2545 = vmax.f32 %v1803, 0.0
    %v2546 = vmax.f32 %v1808, 0.0
    %v2547 = vmax.f32 %v1813, 0.0
    %v2548 = vmax.f32 %v1818, 0.0
    %v2549 = vmax.f32 %v1823, 0.0
    %v2550 = vmax.f32 %v1828, 0.0
    %v2551 = vmax.f32 %v1833, 0.0
    %v2552 = vmax.f32 %v1838, 0.0
    %v2553 = vmax.f32 %v1843, 0.0
    %v2554 = vmax.f32 %v1848, 0.0
    %v2555 = vmax.f32 %v1853, 0.0
    %v2556 = vmax.f32 %v1858, 0.0
    %v2557 = vmax.f32 %v1863, 0.0
    %v2558 = vmax.f32 %v1868, 0.0
    %v2559 = vmax.f32 %v1873, 0.0
    %v2560 = vmax.f32 %v1878, 0.0
    %v2561 = vmax.f32 %v1883, 0.0
    %v2562 = vmax.f32 %v1888, 0.0
    %v2563 = vmax.f32 %v1893, 0.0
    %v2564 = vmax.f32 %v1898, 0.0
    %v2565 = vmax.f32 %v1903, 0.0
    %v2566 = vmax.f32 %v1908, 0.0
    %v2567 = vmax.f32 %v1913, 0.0
    %v2568 = vmax.f32 %v1918, 0.0
    %v2569 = vmax.f32 %v1923, 0.0
    %v2570 = vmax.f32 %v1928, 0.0
    %v2571 = vmax.f32 %v1933, 0.0
    %v2572 = vmax.f32 %v1938, 0.0
    %v2573 = vmax.f32 %v1943, 0.0
    %v2574 = vmax.f32 %v1948, 0.0
    %v2575 = vmax.f32 %v1953, 0.0
    %v2576 = vmax.f32 %v1958, 0.0
    %v2577 = vmax.f32 %v1963, 0.0
    %v2578 = vmax.f32 %v1968, 0.0
    %v2579 = vmax.f32 %v1973, 0.0
    %v2580 = vmax.f32 %v1978, 0.0
    %v2581 = vmax.f32 %v1983, 0.0
    %v2582 = vmax.f32 %v1988, 0.0
    %v2583 = vmax.f32 %v1993, 0.0
    %v2584 = vmax.f32 %v1998, 0.0
    %v2585 = vmax.f32 %v2003, 0.0
    %v2586 = vmax.f32 %v2008, 0.0
    %v2587 = vmax.f32 %v2013, 0.0
    %v2588 = vmax.f32 %v2018, 0.0
    %v2589 = vmax.f32 %v2023, 0.0
    %v2590 = vmax.f32 %v2028, 0.0
    %v2591 = vmax.f32 %v2033, 0.0
    %v2592 = vmax.f32 %v2038, 0.0
    %v2593 = vmax.f32 %v2043, 0.0
    %v2594 = vmax.f32 %v2048, 0.0
    %v2595 = vmax.f32 %v2053, 0.0
    %v2596 = vmax.f32 %v2058, 0.0
    %v2597 = vmax.f32 %v2063, 0.0
    %v2598 = vmax.f32 %v2068, 0.0
    %v2599 = vmax.f32 %v2073, 0.0
    %v2600 = vmax.f32 %v2078, 0.0
    %v2601 = vmax.f32 %v2083, 0.0
    %v2602 = vmax.f32 %v2088, 0.0
    %v2603 = vmax.f32 %v2093, 0.0
    %v2604 = vmax.f32 %v2098, 0.0
    %v2605 = vmax.f32 %v2103, 0.0
    %v2606 = vmax.f32 %v2108, 0.0
    %v2607 = vmax.f32 %v2113, 0.0
    %v2608 = vmax.f32 %v2118, 0.0
    %v2609 = vmax.f32 %v2123, 0.0
    %v2610 = vmax.f32 %v2128, 0.0
    %v2611 = vmax.f32 %v2133, 0.0
    %v2612 = vmax.f32 %v2138, 0.0
    %v2613 = vmax.f32 %v2143, 0.0
    %v2614 = vmax.f32 %v2148, 0.0
    %v2615 = vmax.f32 %v2153, 0.0
    %v2616 = vmax.f32 %v2158, 0.0
    %v2617 = vmax.f32 %v2163, 0.0
    %v2618 = vmax.f32 %v2168, 0.0
    %v2619 = vmax.f32 %v2173, 0.0
    %v2620 = vmax.f32 %v2178, 0.0
    %v2621 = vmax.f32 %v2183, 0.0
    %v2622 = vmax.f32 %v2188, 0.0
    %v2623 = vmax.f32 %v2193, 0.0
    %v2624 = vmax.f32 %v2198, 0.0
    %v2625 = vmax.f32 %v2203, 0.0
    %v2626 = vmax.f32 %v2208, 0.0
    %v2627 = vmax.f32 %v2213, 0.0
    %v2628 = vmax.f32 %v2218, 0.0
    %v2629 = vmax.f32 %v2223, 0.0
    %v2630 = vmax.f32 %v2228, 0.0
    %v2631 = vmax.f32 %v2233, 0.0
    %v2632 = vmax.f32 %v2238, 0.0
    %v2633 = vmax.f32 %v2243, 0.0
    %v2634 = vmax.f32 %v2248, 0.0
    %v2635 = vmax.f32 %v2253, 0.0
    %v2636 = vmax.f32 %v2258, 0.0
    %v2637 = vmax.f32 %v2263, 0.0
    %v2638 = vmax.f32 %v2268, 0.0
    %v2639 = vmax.f32 %v2273, 0.0
    %v2640 = vmax.f32 %v2278, 0.0
    %v2641 = vmax.f32 %v2283, 0.0
    %v2642 = vmax.f32 %v2288, 0.0
    %v2643 = vmax.f32 %v2293, 0.0
    %v2644 = vmax.f32 %v2298, 0.0
    %v2645 = vmax.f32 %v2303, 0.0
    %v2646 = vmax.f32 %v2308, 0.0
    %v2647 = vmax.f32 %v2313, 0.0
    %v2648 = vmax.f32 %v2318, 0.0
    %v2649 = vmax.f32 %v2323, 0.0
    %v2650 = vmax.f32 %v2328, 0.0
    %v2651 = vmax.f32 %v2333, 0.0
    %v2652 = vmax.f32 %v2338, 0.0
    %v2653 = vmax.f32 %v2343, 0.0
    %v2654 = vmax.f32 %v2348, 0.0
    %v2655 = vmax.f32 %v2353, 0.0
    %v2656 = vmax.f32 %v2358, 0.0
    %v2657 = vmax.f32 %v2363, 0.0
    %v2658 = vmax.f32 %v2368, 0.0
    %v2659 = vmax.f32 %v2373, 0.0
    %v2660 = vmax.f32 %v2378, 0.0
    %v2661 = vmax.f32 %v2383, 0.0
    %v2662 = vmax.f32 %v2388, 0.0
    %v2663 = vmax.f32 %v2393, 0.0
    %v2664 = vmax.f32 %v2398, 0.0
    %v2665 = vmax.f32 %v2403, 0.0
    %v2666 = vmax.f32 %v2408, 0.0
    %v2667 = vld [vmem:[#allocation2] sm:$0xff]
    %v2668 = vadd.f32 %v2411, %v2412
    %v2669 = vadd.f32 %v2668, %v2413
    %v2670 = vadd.f32 %v2669, %v2414
    %v2671 = vadd.f32 %v2670, %v2415
    %v2672 = vadd.f32 %v2671, %v2416
    %v2673 = vadd.f32 %v2672, %v2417
    %v2674 = vadd.f32 %v2673, %v2418
    %v2675 = vadd.f32 %v2674, %v2419
    %v2676 = vadd.f32 %v2675, %v2420
    %v2677 = vadd.f32 %v2676, %v2421
    %v2678 = vadd.f32 %v2677, %v2422
    %v2679 = vadd.f32 %v2678, %v2423
    %v2680 = vadd.f32 %v2679, %v2424
    %v2681 = vadd.f32 %v2680, %v2425
    %v2682 = vadd.f32 %v2681, %v2426
    %v2683 = vadd.f32 %v2682, %v2427
    %v2684 = vadd.f32 %v2683, %v2428
    %v2685 = vadd.f32 %v2684, %v2429
    %v2686 = vadd.f32 %v2685, %v2430
    %v2687 = vadd.f32 %v2686, %v2431
    %v2688 = vadd.f32 %v2687, %v2432
    %v2689 = vadd.f32 %v2688, %v2433
    %v2690 = vadd.f32 %v2689, %v2434
    %v2691 = vadd.f32 %v2690, %v2435
    %v2692 = vadd.f32 %v2691, %v2436
    %v2693 = vadd.f32 %v2692, %v2437
    %v2694 = vadd.f32 %v2693, %v2438
    %v2695 = vadd.f32 %v2694, %v2439
    %v2696 = vadd.f32 %v2695, %v2440
    %v2697 = vadd.f32 %v2696, %v2441
    %v2698 = vadd.f32 %v2697, %v2442
    %v2699 = vrot.slane %v2698, 4
    %v2700 = vadd.f32 %v2698, %v2699
    %v2701 = vrot.slane %v2700, 2
    %v2702 = vadd.f32 %v2700, %v2701
    %v2703 = vrot.slane %v2702, 1
    %v2704 = vadd.f32 %v2702, %v2703
    %v2705 = vadd.f32 %v2443, %v2444
    %v2706 = vadd.f32 %v2705, %v2445
    %v2707 = vadd.f32 %v2706, %v2446
    %v2708 = vadd.f32 %v2707, %v2447
    %v2709 = vadd.f32 %v2708, %v2448
    %v2710 = vadd.f32 %v2709, %v2449
    %v2711 = vadd.f32 %v2710, %v2450
    %v2712 = vadd.f32 %v2711, %v2451
    %v2713 = vadd.f32 %v2712, %v2452
    %v2714 = vadd.f32 %v2713, %v2453
    %v2715 = vadd.f32 %v2714, %v2454
    %v2716 = vadd.f32 %v2715, %v2455
    %v2717 = vadd.f32 %v2716, %v2456
    %v2718 = vadd.f32 %v2717, %v2457
    %v2719 = vadd.f32 %v2718, %v2458
    %v2720 = vadd.f32 %v2719, %v2459
    %v2721 = vadd.f32 %v2720, %v2460
    %v2722 = vadd.f32 %v2721, %v2461
    %v2723 = vadd.f32 %v2722, %v2462
    %v2724 = vadd.f32 %v2723, %v2463
    %v2725 = vadd.f32 %v2724, %v2464
    %v2726 = vadd.f32 %v2725, %v2465
    %v2727 = vadd.f32 %v2726, %v2466
    %v2728 = vadd.f32 %v2727, %v2467
    %v2729 = vadd.f32 %v2728, %v2468
    %v2730 = vadd.f32 %v2729, %v2469
    %v2731 = vadd.f32 %v2730, %v2470
    %v2732 = vadd.f32 %v2731, %v2471
    %v2733 = vadd.f32 %v2732, %v2472
    %v2734 = vadd.f32 %v2733, %v2473
    %v2735 = vadd.f32 %v2734, %v2474
    %v2736 = vrot.slane %v2735, 4
    %v2737 = vadd.f32 %v2735, %v2736
    %v2738 = vrot.slane %v2737, 2
    %v2739 = vadd.f32 %v2737, %v2738
    %v2740 = vrot.slane %v2739, 1
    %v2741 = vadd.f32 %v2739, %v2740
    %v2742 = vadd.f32 %v2475, %v2476
    %v2743 = vadd.f32 %v2742, %v2477
    %v2744 = vadd.f32 %v2743, %v2478
    %v2745 = vadd.f32 %v2744, %v2479
    %v2746 = vadd.f32 %v2745, %v2480
    %v2747 = vadd.f32 %v2746, %v2481
    %v2748 = vadd.f32 %v2747, %v2482
    %v2749 = vadd.f32 %v2748, %v2483
    %v2750 = vadd.f32 %v2749, %v2484
    %v2751 = vadd.f32 %v2750, %v2485
    %v2752 = vadd.f32 %v2751, %v2486
    %v2753 = vadd.f32 %v2752, %v2487
    %v2754 = vadd.f32 %v2753, %v2488
    %v2755 = vadd.f32 %v2754, %v2489
    %v2756 = vadd.f32 %v2755, %v2490
    %v2757 = vadd.f32 %v2756, %v2491
    %v2758 = vadd.f32 %v2757, %v2492
    %v2759 = vadd.f32 %v2758, %v2493
    %v2760 = vadd.f32 %v2759, %v2494
    %v2761 = vadd.f32 %v2760, %v2495
    %v2762 = vadd.f32 %v2761, %v2496
    %v2763 = vadd.f32 %v2762, %v2497
    %v2764 = vadd.f32 %v2763, %v2498
    %v2765 = vadd.f32 %v2764, %v2499
    %v2766 = vadd.f32 %v2765, %v2500
    %v2767 = vadd.f32 %v2766, %v2501
    %v2768 = vadd.f32 %v2767, %v2502
    %v2769 = vadd.f32 %v2768, %v2503
    %v2770 = vadd.f32 %v2769, %v2504
    %v2771 = vadd.f32 %v2770, %v2505
    %v2772 = vadd.f32 %v2771, %v2506
    %v2773 = vrot.slane %v2772, 4
    %v2774 = vadd.f32 %v2772, %v2773
    %v2775 = vrot.slane %v2774, 2
    %v2776 = vadd.f32 %v2774, %v2775
    %v2777 = vrot.slane %v2776, 1
    %v2778 = vadd.f32 %v2776, %v2777
    %v2779 = vadd.f32 %v2507, %v2508
    %v2780 = vadd.f32 %v2779, %v2509
    %v2781 = vadd.f32 %v2780, %v2510
    %v2782 = vadd.f32 %v2781, %v2511
    %v2783 = vadd.f32 %v2782, %v2512
    %v2784 = vadd.f32 %v2783, %v2513
    %v2785 = vadd.f32 %v2784, %v2514
    %v2786 = vadd.f32 %v2785, %v2515
    %v2787 = vadd.f32 %v2786, %v2516
    %v2788 = vadd.f32 %v2787, %v2517
    %v2789 = vadd.f32 %v2788, %v2518
    %v2790 = vadd.f32 %v2789, %v2519
    %v2791 = vadd.f32 %v2790, %v2520
    %v2792 = vadd.f32 %v2791, %v2521
    %v2793 = vadd.f32 %v2792, %v2522
    %v2794 = vadd.f32 %v2793, %v2523
    %v2795 = vadd.f32 %v2794, %v2524
    %v2796 = vadd.f32 %v2795, %v2525
    %v2797 = vadd.f32 %v2796, %v2526
    %v2798 = vadd.f32 %v2797, %v2527
    %v2799 = vadd.f32 %v2798, %v2528
    %v2800 = vadd.f32 %v2799, %v2529
    %v2801 = vadd.f32 %v2800, %v2530
    %v2802 = vadd.f32 %v2801, %v2531
    %v2803 = vadd.f32 %v2802, %v2532
    %v2804 = vadd.f32 %v2803, %v2533
    %v2805 = vadd.f32 %v2804, %v2534
    %v2806 = vadd.f32 %v2805, %v2535
    %v2807 = vadd.f32 %v2806, %v2536
    %v2808 = vadd.f32 %v2807, %v2537
    %v2809 = vadd.f32 %v2808, %v2538
    %v2810 = vrot.slane %v2809, 4
    %v2811 = vadd.f32 %v2809, %v2810
    %v2812 = vrot.slane %v2811, 2
    %v2813 = vadd.f32 %v2811, %v2812
    %v2814 = vrot.slane %v2813, 1
    %v2815 = vadd.f32 %v2813, %v2814
    %v2816 = vadd.f32 %v2539, %v2540
    %v2817 = vadd.f32 %v2816, %v2541
    %v2818 = vadd.f32 %v2817, %v2542
    %v2819 = vadd.f32 %v2818, %v2543
    %v2820 = vadd.f32 %v2819, %v2544
    %v2821 = vadd.f32 %v2820, %v2545
    %v2822 = vadd.f32 %v2821, %v2546
    %v2823 = vadd.f32 %v2822, %v2547
    %v2824 = vadd.f32 %v2823, %v2548
    %v2825 = vadd.f32 %v2824, %v2549
    %v2826 = vadd.f32 %v2825, %v2550
    %v2827 = vadd.f32 %v2826, %v2551
    %v2828 = vadd.f32 %v2827, %v2552
    %v2829 = vadd.f32 %v2828, %v2553
    %v2830 = vadd.f32 %v2829, %v2554
    %v2831 = vadd.f32 %v2830, %v2555
    %v2832 = vadd.f32 %v2831, %v2556
    %v2833 = vadd.f32 %v2832, %v2557
    %v2834 = vadd.f32 %v2833, %v2558
    %v2835 = vadd.f32 %v2834, %v2559
    %v2836 = vadd.f32 %v2835, %v2560
    %v2837 = vadd.f32 %v2836, %v2561
    %v2838 = vadd.f32 %v2837, %v2562
    %v2839 = vadd.f32 %v2838, %v2563
    %v2840 = vadd.f32 %v2839, %v2564
    %v2841 = vadd.f32 %v2840, %v2565
    %v2842 = vadd.f32 %v2841, %v2566
    %v2843 = vadd.f32 %v2842, %v2567
    %v2844 = vadd.f32 %v2843, %v2568
    %v2845 = vadd.f32 %v2844, %v2569
    %v2846 = vadd.f32 %v2845, %v2570
    %v2847 = vrot.slane %v2846, 4
    %v2848 = vadd.f32 %v2846, %v2847
    %v2849 = vrot.slane %v2848, 2
    %v2850 = vadd.f32 %v2848, %v2849
    %v2851 = vrot.slane %v2850, 1
    %v2852 = vadd.f32 %v2850, %v2851
    %v2853 = vadd.f32 %v2571, %v2572
    %v2854 = vadd.f32 %v2853, %v2573
    %v2855 = vadd.f32 %v2854, %v2574
    %v2856 = vadd.f32 %v2855, %v2575
    %v2857 = vadd.f32 %v2856, %v2576
    %v2858 = vadd.f32 %v2857, %v2577
    %v2859 = vadd.f32 %v2858, %v2578
    %v2860 = vadd.f32 %v2859, %v2579
    %v2861 = vadd.f32 %v2860, %v2580
    %v2862 = vadd.f32 %v2861, %v2581
    %v2863 = vadd.f32 %v2862, %v2582
    %v2864 = vadd.f32 %v2863, %v2583
    %v2865 = vadd.f32 %v2864, %v2584
    %v2866 = vadd.f32 %v2865, %v2585
    %v2867 = vadd.f32 %v2866, %v2586
    %v2868 = vadd.f32 %v2867, %v2587
    %v2869 = vadd.f32 %v2868, %v2588
    %v2870 = vadd.f32 %v2869, %v2589
    %v2871 = vadd.f32 %v2870, %v2590
    %v2872 = vadd.f32 %v2871, %v2591
    %v2873 = vadd.f32 %v2872, %v2592
    %v2874 = vadd.f32 %v2873, %v2593
    %v2875 = vadd.f32 %v2874, %v2594
    %v2876 = vadd.f32 %v2875, %v2595
    %v2877 = vadd.f32 %v2876, %v2596
    %v2878 = vadd.f32 %v2877, %v2597
    %v2879 = vadd.f32 %v2878, %v2598
    %v2880 = vadd.f32 %v2879, %v2599
    %v2881 = vadd.f32 %v2880, %v2600
    %v2882 = vadd.f32 %v2881, %v2601
    %v2883 = vadd.f32 %v2882, %v2602
    %v2884 = vrot.slane %v2883, 4
    %v2885 = vadd.f32 %v2883, %v2884
    %v2886 = vrot.slane %v2885, 2
    %v2887 = vadd.f32 %v2885, %v2886
    %v2888 = vrot.slane %v2887, 1
    %v2889 = vadd.f32 %v2887, %v2888
    %v2890 = vadd.f32 %v2603, %v2604
    %v2891 = vadd.f32 %v2890, %v2605
    %v2892 = vadd.f32 %v2891, %v2606
    %v2893 = vadd.f32 %v2892, %v2607
    %v2894 = vadd.f32 %v2893, %v2608
    %v2895 = vadd.f32 %v2894, %v2609
    %v2896 = vadd.f32 %v2895, %v2610
    %v2897 = vadd.f32 %v2896, %v2611
    %v2898 = vadd.f32 %v2897, %v2612
    %v2899 = vadd.f32 %v2898, %v2613
    %v2900 = vadd.f32 %v2899, %v2614
    %v2901 = vadd.f32 %v2900, %v2615
    %v2902 = vadd.f32 %v2901, %v2616
    %v2903 = vadd.f32 %v2902, %v2617
    %v2904 = vadd.f32 %v2903, %v2618
    %v2905 = vadd.f32 %v2904, %v2619
    %v2906 = vadd.f32 %v2905, %v2620
    %v2907 = vadd.f32 %v2906, %v2621
    %v2908 = vadd.f32 %v2907, %v2622
    %v2909 = vadd.f32 %v2908, %v2623
    %v2910 = vadd.f32 %v2909, %v2624
    %v2911 = vadd.f32 %v2910, %v2625
    %v2912 = vadd.f32 %v2911, %v2626
    %v2913 = vadd.f32 %v2912, %v2627
    %v2914 = vadd.f32 %v2913, %v2628
    %v2915 = vadd.f32 %v2914, %v2629
    %v2916 = vadd.f32 %v2915, %v2630
    %v2917 = vadd.f32 %v2916, %v2631
    %v2918 = vadd.f32 %v2917, %v2632
    %v2919 = vadd.f32 %v2918, %v2633
    %v2920 = vadd.f32 %v2919, %v2634
    %v2921 = vrot.slane %v2920, 4
    %v2922 = vadd.f32 %v2920, %v2921
    %v2923 = vrot.slane %v2922, 2
    %v2924 = vadd.f32 %v2922, %v2923
    %v2925 = vrot.slane %v2924, 1
    %v2926 = vadd.f32 %v2924, %v2925
    %v2927 = vadd.f32 %v2635, %v2636
    %v2928 = vadd.f32 %v2927, %v2637
    %v2929 = vadd.f32 %v2928, %v2638
    %v2930 = vadd.f32 %v2929, %v2639
    %v2931 = vadd.f32 %v2930, %v2640
    %v2932 = vadd.f32 %v2931, %v2641
    %v2933 = vadd.f32 %v2932, %v2642
    %v2934 = vadd.f32 %v2933, %v2643
    %v2935 = vadd.f32 %v2934, %v2644
    %v2936 = vadd.f32 %v2935, %v2645
    %v2937 = vadd.f32 %v2936, %v2646
    %v2938 = vadd.f32 %v2937, %v2647
    %v2939 = vadd.f32 %v2938, %v2648
    %v2940 = vadd.f32 %v2939, %v2649
    %v2941 = vadd.f32 %v2940, %v2650
    %v2942 = vadd.f32 %v2941, %v2651
    %v2943 = vadd.f32 %v2942, %v2652
    %v2944 = vadd.f32 %v2943, %v2653
    %v2945 = vadd.f32 %v2944, %v2654
    %v2946 = vadd.f32 %v2945, %v2655
    %v2947 = vadd.f32 %v2946, %v2656
    %v2948 = vadd.f32 %v2947, %v2657
    %v2949 = vadd.f32 %v2948, %v2658
    %v2950 = vadd.f32 %v2949, %v2659
    %v2951 = vadd.f32 %v2950, %v2660
    %v2952 = vadd.f32 %v2951, %v2661
    %v2953 = vadd.f32 %v2952, %v2662
    %v2954 = vadd.f32 %v2953, %v2663
    %v2955 = vadd.f32 %v2954, %v2664
    %v2956 = vadd.f32 %v2955, %v2665
    %v2957 = vadd.f32 %v2956, %v2666
    %v2958 = vrot.slane %v2957, 4
    %v2959 = vadd.f32 %v2957, %v2958
    %v2960 = vrot.slane %v2959, 2
    %v2961 = vadd.f32 %v2959, %v2960
    %v2962 = vrot.slane %v2961, 1
    %v2963 = vadd.f32 %v2961, %v2962
    %vm2972 = vcmask 1041409
    %v2973 = vsel %vm2972, %v2741, %v2704
    %vm2974 = vcmask 1042434
    %v2975 = vsel %vm2974, %v2778, %v2973
    %vm2976 = vcmask 1043459
    %v2977 = vsel %vm2976, %v2815, %v2975
    %vm2978 = vcmask 1044484
    %v2979 = vsel %vm2978, %v2852, %v2977
    %vm2980 = vcmask 1045509
    %v2981 = vsel %vm2980, %v2889, %v2979
    %vm2982 = vcmask 1046534
    %v2983 = vsel %vm2982, %v2926, %v2981
    %vm2984 = vcmask 1047559
    %v2985 = vsel %vm2984, %v2963, %v2983
    %v2987 = vadd.f32 %v2667, %v2985
    %2988 = vst [vmem:[#allocation2] sm:$0xff] %v2987
    // Predicated region
    $region26: #{tpu_custom_call.1} parent=1 // pred_check
      %p2989 = pneg %p24
    $region27: #{tpu_custom_call.1} parent=1 // pred_check_branch
      %2991 = sbr.rel (%p2989) target = $region29
    $region28: #{tpu_custom_call.1} parent=1 // pred_region
      %v2992 = vld [vmem:[#allocation2] sm:$0xff]
      %v2993 = vmul.f32 %v2992, 0.00390625
      %2994 = vst [vmem:[#allocation5] sm:$0xff] %v2993
      %v2995 = vld [vmem:[%s3] sm:$0xff]
      %v2996 = vld [vmem:[%s3 + $0x8] sm:$0xff]
      %v2997 = vld [vmem:[%s3 + $0x10] sm:$0xff]
      %v2998 = vld [vmem:[%s3 + $0x18] sm:$0xff]
      %v2999 = vld [vmem:[%s3 + $0x20] sm:$0xff]
      %v3000 = vld [vmem:[%s3 + $0x28] sm:$0xff]
      %v3001 = vld [vmem:[%s3 + $0x30] sm:$0xff]
      %v3002 = vld [vmem:[%s3 + $0x38] sm:$0xff]
      %v3003 = vld [vmem:[%s3 + $0x40] sm:$0xff]
      %v3004 = vld [vmem:[%s3 + $0x48] sm:$0xff]
      %v3005 = vld [vmem:[%s3 + $0x50] sm:$0xff]
      %v3006 = vld [vmem:[%s3 + $0x58] sm:$0xff]
      %v3007 = vld [vmem:[%s3 + $0x60] sm:$0xff]
      %v3008 = vld [vmem:[%s3 + $0x68] sm:$0xff]
      %v3009 = vld [vmem:[%s3 + $0x70] sm:$0xff]
      %v3010 = vld [vmem:[%s3 + $0x78] sm:$0xff]
      %v3011 = vld [vmem:[%s4] sm:$0x1]
      %v3013 = vlaneseq
      %v3014 = vshrl.u32 %v3013, 7
      %v3015 = vsub.s32 0, %v3014
      %v3016 = vrot.slane %v3011, %v3015
      %3018 = vmatprep.subr.mxu0 0.0
      %3019 = vmatpush1.msra.mxu0 %v2995
      %3020 = vmatprep.subr.mxu0 0.0
      %3021 = vmatpush1.msra.mxu0 %v2996
      %3022 = vmatprep.subr.mxu0 0.0
      %3023 = vmatpush1.msra.mxu0 %v2997
      %3024 = vmatprep.subr.mxu0 0.0
      %3025 = vmatpush1.msra.mxu0 %v2998
      %3026 = vmatprep.subr.mxu0 0.0
      %3027 = vmatpush1.msra.mxu0 %v2999
      %3028 = vmatprep.subr.mxu0 0.0
      %3029 = vmatpush1.msra.mxu0 %v3000
      %3030 = vmatprep.subr.mxu0 0.0
      %3031 = vmatpush1.msra.mxu0 %v3001
      %3032 = vmatprep.subr.mxu0 0.0
      %3033 = vmatpush1.msra.mxu0 %v3002
      %3034 = vmatprep.subr.mxu0 0.0
      %3035 = vmatpush1.msra.mxu0 %v3003
      %3036 = vmatprep.subr.mxu0 0.0
      %3037 = vmatpush1.msra.mxu0 %v3004
      %3038 = vmatprep.subr.mxu0 0.0
      %3039 = vmatpush1.msra.mxu0 %v3005
      %3040 = vmatprep.subr.mxu0 0.0
      %3041 = vmatpush1.msra.mxu0 %v3006
      %3042 = vmatprep.subr.mxu0 0.0
      %3043 = vmatpush1.msra.mxu0 %v3007
      %3044 = vmatprep.subr.mxu0 0.0
      %3045 = vmatpush1.msra.mxu0 %v3008
      %3046 = vmatprep.subr.mxu0 0.0
      %3047 = vmatpush1.msra.mxu0 %v3009
      %3048 = vmatprep.subr.mxu0 0.0
      %3049 = vmatpush1.msra.mxu0 %v3010
      %3050 = vmatprep.subr.mxu0 0.0
      %3051 = vmatpush1.msra.mxu0 0.0
      %3052 = vmatprep.subr.mxu0 0.0
      %3053 = vmatpush1.msra.mxu0 0.0
      %3054 = vmatprep.subr.mxu0 0.0
      %3055 = vmatpush1.msra.mxu0 0.0
      %3056 = vmatprep.subr.mxu0 0.0
      %3057 = vmatpush1.msra.mxu0 0.0
      %3058 = vmatprep.subr.mxu0 0.0
      %3059 = vmatpush1.msra.mxu0 0.0
      %3060 = vmatprep.subr.mxu0 0.0
      %3061 = vmatpush1.msra.mxu0 0.0
      %3062 = vmatprep.subr.mxu0 0.0
      %3063 = vmatpush1.msra.mxu0 0.0
      %3064 = vmatprep.subr.mxu0 0.0
      %3065 = vmatpush1.msra.mxu0 0.0
      %3066 = vmatprep.subr.mxu0 0.0
      %3067 = vmatpush1.msra.mxu0 0.0
      %3068 = vmatprep.subr.mxu0 0.0
      %3069 = vmatpush1.msra.mxu0 0.0
      %3070 = vmatprep.subr.mxu0 0.0
      %3071 = vmatpush1.msra.mxu0 0.0
      %3072 = vmatprep.subr.mxu0 0.0
      %3073 = vmatpush1.msra.mxu0 0.0
      %3074 = vmatprep.subr.mxu0 0.0
      %3075 = vmatpush1.msra.mxu0 0.0
      %3076 = vmatprep.subr.mxu0 0.0
      %3077 = vmatpush1.msra.mxu0 0.0
      %3078 = vmatprep.subr.mxu0 0.0
      %3079 = vmatpush1.msra.mxu0 0.0
      %3080 = vmatprep.subr.mxu0 0.0
      %3081 = vmatpush1.msra.mxu0 0.0
      %3082 = vmatprep.mubr.f32.mxu0 0.0
      %3083 = vmatmul.mubr.f32.gmra.mrb[0].mxu0 %v2993
      %v3084 = vpop.f32.mrb[0].mxu0
      %v3085 = vadd.f32 %v3016, %v3084
      %v3086 = vpop.f32.mrb[0].mxu0
      %3087 = vdwg.mxu0
      %3088 = vst [vmem:[#allocation3] sm:$0xff] %v3085
    $region29: #{tpu_custom_call.1} parent=1 // pred_fallthru
      _
    // Predicated region
    $region30: #{tpu_custom_call.1} parent=1 // pred_check
      _
    $region31: #{tpu_custom_call.1} parent=1 // pred_check_branch
      %3090 = sbr.rel (0) target = $region33
    $region32: #{tpu_custom_call.1} parent=1 // pred_region
      %s3092 = ssub.s32 128, 128
      %3093 = vsyncadd [#allocation4], %s3092
      %s3095 = sshll.u32 [#allocation3], 4
      %s3096 = int_to_ptr.vmem [resolvable:$true] %s3095
      %3098 = dma.vmem_to_hbm [thread:$0]  %s3096, 128, %s5, [#allocation4]
    $region33: #{tpu_custom_call.1} parent=1 // pred_fallthru
      _
    // Predicated region
    $region34: #{tpu_custom_call.1} parent=1 // pred_check
      _
    $region35: #{tpu_custom_call.1} parent=1 // pred_check_branch
      %3100 = sbr.rel (0) target = $region37
    $region36: #{tpu_custom_call.1} parent=1 // pred_region
      %s3102 = ssub.s32 128, 128
      %3103 = vsyncadd [#allocation6], %s3102
      %s3105 = sshll.u32 [#allocation5], 4
      %s3106 = int_to_ptr.vmem [resolvable:$true] %s3105
      %3108 = dma.vmem_to_hbm [thread:$0]  %s3106, 128, %s6, [#allocation6]
    $region37: #{tpu_custom_call.1} parent=1 // pred_fallthru
      _
    // Predicated region
    $region38: #{tpu_custom_call.1} parent=1 // pred_check
      _
    $region39: #{tpu_custom_call.1} parent=1 // pred_check_branch
      %3110 = sbr.rel (0) target = $region41
    $region40: #{tpu_custom_call.1} parent=1 // pred_region
      %3111 = dma.done [#allocation4], 128
    $region41: #{tpu_custom_call.1} parent=1 // pred_fallthru
      _
    // Predicated region
    $region42: #{tpu_custom_call.1} parent=1 // pred_check
      _
    $region43: #{tpu_custom_call.1} parent=1 // pred_check_branch
      %3113 = sbr.rel (0) target = $region45
    $region44: #{tpu_custom_call.1} parent=1 // pred_region
      %3114 = dma.done [#allocation6], 128
    $region45: #{tpu_custom_call.1} parent=1 // pred_fallthru
      _
    %3115 = vsyncpa [#allocation4], 1
    %3116 = vsyncpa [#allocation6], 1

</llo_original>
